<compile_context>
chip_gen: v7x
topology: tpu7x:2x2x1
jax: 0.10.0
libtpu: 0.0.40
codegen_flags: <defaults>
</compile_context>

<pallas_src>
import jax
import jax.numpy as jnp
from jax.experimental import pallas as pl
from jax.experimental.pallas import tpu as pltpu


def _round_up(x, m):
    return ((x + m - 1) // m) * m


def _pad_to(x, shape):
    return jnp.pad(x, [(0, t - s) for s, t in zip(x.shape, shape)])


def make_actor_kernel(feature_dim):
    inv_n = 1.0 / float(feature_dim)  # LayerNorm over the REAL (unpadded) dim

    def actor_kernel(obs_ref,                        # (tb, repr_dim), weight dtype
                     w1_ref, b1_ref, g_ref, be_ref,  # trunk Linear + LayerNorm
                     w2_ref, b2_ref,                 # policy layer 1
                     w3_ref, b3_ref,                 # policy layer 2
                     w4_ref, b4_ref,                 # policy layer 3 (padded)
                     mu_ref):                        # (tb, ad_pad)
        wdt = w1_ref.dtype

        # trunk: Linear -> LayerNorm -> Tanh (LN math in f32).  Padded feature
        # lanes are exactly zero (zero w1 cols / b1), so one-pass sums are
        # correct with inv_n = 1/feature_dim.
        h = jnp.dot(obs_ref[...], w1_ref[...],
                    preferred_element_type=jnp.float32) + b1_ref[...]
        s = jnp.sum(h, axis=-1, keepdims=True)
        sq = jnp.sum(h * h, axis=-1, keepdims=True)
        mean = s * inv_n
        var = jnp.maximum(sq * inv_n - mean * mean, 0.0)   # clamp: can round < 0
        h = (h - mean) * jax.lax.rsqrt(var + 1e-5)
        h = h * g_ref[...] + be_ref[...]                   # padded lanes -> 0
        h = jnp.tanh(h)

        # policy: Linear -> ReLU -> Linear -> ReLU -> Linear, then tanh.
        z = jnp.dot(h.astype(wdt), w2_ref[...],
                    preferred_element_type=jnp.float32) + b2_ref[...]
        z = jnp.maximum(z, 0.0)
        z = jnp.dot(z.astype(wdt), w3_ref[...],
                    preferred_element_type=jnp.float32) + b3_ref[...]
        z = jnp.maximum(z, 0.0)
        mu = jnp.dot(z.astype(wdt), w4_ref[...],
                     preferred_element_type=jnp.float32) + b4_ref[...]
        mu_ref[...] = jnp.tanh(mu).astype(mu_ref.dtype)

    return actor_kernel


def _pick_tb(B):
    """Batch tile: <= 256 rows, multiple of 8, and >= 2 grid steps when B >= 16
    so the 'parallel' batch axis can split across v7x's two TensorCores.
    (On v5e/v7x pass tb=128 explicitly if preferred.)"""
    tb = min(256, _round_up(B, 8))
    if B >= 16 and _round_up(B, tb) // tb < 2:
        tb = _round_up(max(8, B // 2), 8)
    return tb


def _vmem_limit_bytes(tb, repr_dim, fd_pad, hd_pad, ad_pad, w_itemsize):
    obs = tb * repr_dim * w_itemsize * 2          # double-buffered obs tile
    out = tb * ad_pad * 4 * 2                     # double-buffered mu tile
    wts = (repr_dim * fd_pad + fd_pad * hd_pad
           + hd_pad * hd_pad + hd_pad * ad_pad) * w_itemsize
    small = (3 * fd_pad + 2 * hd_pad + ad_pad) * 4
    acts = 4 * tb * max(fd_pad, hd_pad) * 4       # intermediate headroom
    total = obs + out + 2 * wts + small + acts    # 2x wts: slack if double-buffered
    return int(min(max(total * 3 // 2 + (4 << 20), 32 << 20), 100 << 20))


def actor_forward(obs, std, params, *, tb=None, out_dtype=jnp.float32):
    """Fused Actor forward.  Returns (mu, std) parameterizing TruncatedNormal."""
    B, repr_dim = obs.shape
    feature_dim = params["w1"].shape[1]
    hidden_dim = params["w2"].shape[1]
    action_dim = params["w4"].shape[1]
    wdt = params["w1"].dtype

    # Cast obs to the weight dtype BEFORE the call: halves the dominant DMA
    # stream when weights are bf16.
    obs = obs.astype(wdt)

    if tb is None:
        tb = _pick_tb(B)
    B_pad = _round_up(B, tb)
    if B_pad != B:
        obs = jnp.pad(obs, ((0, B_pad - B), (0, 0)))

    fd_pad = _round_up(feature_dim, 128)
    hd_pad = _round_up(hidden_dim, 128)
    ad_pad = _round_up(action_dim, 128)

    # Zero-pad every dense dim to a multiple of 128 -> lane-dense vregs and
    # unmasked stores.  Zero pads are inert (ReLU(0)=0, tanh(0)=0, gamma=beta=0).
    w1 = _pad_to(params["w1"], (repr_dim, fd_pad))
    b1 = _pad_to(params["b1"], (1, fd_pad))
    g = _pad_to(params["ln_g"], (1, fd_pad))
    be = _pad_to(params["ln_b"], (1, fd_pad))
    w2 = _pad_to(params["w2"], (fd_pad, hd_pad))
    b2 = _pad_to(params["b2"], (1, hd_pad))
    w3 = _pad_to(params["w3"], (hd_pad, hd_pad))
    b3 = _pad_to(params["b3"], (1, hd_pad))
    w4 = _pad_to(params["w4"], (hd_pad, ad_pad))
    b4 = _pad_to(params["b4"], (1, ad_pad))
    consts = (w1, b1, g, be, w2, b2, w3, b3, w4, b4)

    kernel = make_actor_kernel(feature_dim)
    vmem_limit = _vmem_limit_bytes(tb, repr_dim, fd_pad, hd_pad, ad_pad,
                                   jnp.dtype(wdt).itemsize)

    def run(single_buffer_weights):
        def const_spec(a):
            nd = a.ndim
            idx = lambda i, _nd=nd: (0,) * _nd
            if single_buffer_weights:
                # Constant index_map -> double buffering is pure VMEM waste.
                return pl.BlockSpec(a.shape, idx, pipeline_mode=pl.Buffered(1))
            return pl.BlockSpec(a.shape, idx)

        grid_spec = pltpu.PrefetchScalarGridSpec(
            num_scalar_prefetch=0,
            grid=(B_pad // tb,),
            in_specs=[pl.BlockSpec((tb, repr_dim), lambda i: (i, 0))]
                     + [const_spec(a) for a in consts],
            out_specs=pl.BlockSpec((tb, ad_pad), lambda i: (i, 0)),
        )
        return pl.pallas_call(
            kernel,
            grid_spec=grid_spec,
            out_shape=jax.ShapeDtypeStruct((B_pad, ad_pad), out_dtype),
            compiler_params=pltpu.CompilerParams(
                dimension_semantics=("parallel",),
                vmem_limit_bytes=vmem_limit),
        )(obs, *consts)

    try:
        mu_padded = run(True)
    except Exception:   # runtime without single-buffered pipeline_mode support
        mu_padded = run(False)

    mu = mu_padded[:B, :action_dim]
    # std is a constant broadcast with no kernel dependence -> left to XLA.
    std_out = jnp.full((B, action_dim), std, out_dtype)
    return mu, std_out


def actor_ref(obs, std, params):
    h = obs @ params["w1"].astype(jnp.float32) + params["b1"]
    mean = jnp.mean(h, axis=-1, keepdims=True)
    var = jnp.mean((h - mean) ** 2, axis=-1, keepdims=True)
    h = (h - mean) * jax.lax.rsqrt(var + 1e-5)
    h = h * params["ln_g"] + params["ln_b"]
    h = jnp.tanh(h)
    z = jnp.maximum(h @ params["w2"].astype(jnp.float32) + params["b2"], 0.0)
    z = jnp.maximum(z @ params["w3"].astype(jnp.float32) + params["b3"], 0.0)
    mu = jnp.tanh(z @ params["w4"].astype(jnp.float32) + params["b4"])
    return mu, jnp.ones_like(mu) * std


def init_params(key, repr_dim, feature_dim, hidden_dim, action_dim):
    ks = jax.random.split(key, 4)

    def lin(k, fan_in, fan_out):
        scale = 1.0 / jnp.sqrt(fan_in)
        return jax.random.normal(k, (fan_in, fan_out), jnp.float32) * scale

    return {
        "w1": lin(ks[0], repr_dim, feature_dim),
        "b1": jnp.zeros((1, feature_dim), jnp.float32),
        "ln_g": jnp.ones((1, feature_dim), jnp.float32),
        "ln_b": jnp.zeros((1, feature_dim), jnp.float32),
        "w2": lin(ks[1], feature_dim, hidden_dim),
        "b2": jnp.zeros((1, hidden_dim), jnp.float32),
        "w3": lin(ks[2], hidden_dim, hidden_dim),
        "b3": jnp.zeros((1, hidden_dim), jnp.float32),
        "w4": lin(ks[3], hidden_dim, action_dim),
        "b4": jnp.zeros((1, action_dim), jnp.float32),
    }


if __name__ == "__main__":
    B, repr_dim, feature_dim, hidden_dim, action_dim = 16, 32, 32, 32, 4
    std = 0.2

    key = jax.random.PRNGKey(0)
    k_obs, k_params = jax.random.split(key)
    obs = jax.random.normal(k_obs, (B, repr_dim), jnp.float32)
    params = init_params(k_params, repr_dim, feature_dim, hidden_dim, action_dim)

    # f32 weights: tight tolerance vs reference (grid of 2 steps: tb=8).
    mu, std_out = jax.block_until_ready(actor_forward(obs, std, params))
    mu_ref, std_ref = actor_ref(obs, std, params)
    assert mu.shape == (B, action_dim) and std_out.shape == (B, action_dim)
    assert jnp.allclose(mu, mu_ref, atol=1e-5), "mu mismatch vs reference (f32)"
    assert jnp.allclose(std_out, std_ref, atol=1e-6), "std mismatch vs reference"

    # Ragged batch (exercises batch padding path, B not a multiple of the tile).
    obs_r = obs[:12]
    mu_r, _ = jax.block_until_ready(actor_forward(obs_r, std, params))
    mu_r_ref, _ = actor_ref(obs_r, std, params)
    assert mu_r.shape == (12, action_dim)
    assert jnp.allclose(mu_r, mu_r_ref, atol=1e-5), "mu mismatch (ragged batch)"

    # bf16 weights (obs cast to bf16 in the wrapper, f32 accumulation).
    params_bf16 = dict(params)
    for name in ("w1", "w2", "w3", "w4"):
        params_bf16[name] = params[name].astype(jnp.bfloat16)
    mu_bf16, _ = jax.block_until_ready(actor_forward(obs, std, params_bf16))
    assert jnp.allclose(mu_bf16, mu_ref, atol=5e-2), "mu mismatch vs reference (bf16)"

    print("KERNEL_OK")
</pallas_src>

<mosaic_0001>
module attributes {stable_mosaic.version = 11 : i64} {
  func.func @actor_kernel(%arg0: i32, %arg1: memref<8x32xf32, #tpu.memory_space<vmem>>, %arg2: memref<32x128xf32, #tpu.memory_space<vmem>>, %arg3: memref<1x128xf32, #tpu.memory_space<vmem>>, %arg4: memref<1x128xf32, #tpu.memory_space<vmem>>, %arg5: memref<1x128xf32, #tpu.memory_space<vmem>>, %arg6: memref<128x128xf32, #tpu.memory_space<vmem>>, %arg7: memref<1x128xf32, #tpu.memory_space<vmem>>, %arg8: memref<128x128xf32, #tpu.memory_space<vmem>>, %arg9: memref<1x128xf32, #tpu.memory_space<vmem>>, %arg10: memref<128x128xf32, #tpu.memory_space<vmem>>, %arg11: memref<1x128xf32, #tpu.memory_space<vmem>>, %arg12: memref<8x128xf32, #tpu.memory_space<vmem>>) attributes {dimension_semantics = [#tpu.dimension_semantics<parallel>], iteration_bounds = array<i64: 2>, scalar_prefetch = 0 : i64, scratch_operands = 0 : i64, tpu.core_type = #tpu.core_type<tc>, window_params = [{transform_indices = @transform_0, window_bounds = array<i64: 8, 32>}, {pipeline_mode = #tpu.pipeline_mode<synchronous>, transform_indices = @transform_1, window_bounds = array<i64: 32, 128>}, {pipeline_mode = #tpu.pipeline_mode<synchronous>, transform_indices = @transform_2, window_bounds = array<i64: 1, 128>}, {pipeline_mode = #tpu.pipeline_mode<synchronous>, transform_indices = @transform_3, window_bounds = array<i64: 1, 128>}, {pipeline_mode = #tpu.pipeline_mode<synchronous>, transform_indices = @transform_4, window_bounds = array<i64: 1, 128>}, {pipeline_mode = #tpu.pipeline_mode<synchronous>, transform_indices = @transform_5, window_bounds = array<i64: 128, 128>}, {pipeline_mode = #tpu.pipeline_mode<synchronous>, transform_indices = @transform_6, window_bounds = array<i64: 1, 128>}, {pipeline_mode = #tpu.pipeline_mode<synchronous>, transform_indices = @transform_7, window_bounds = array<i64: 128, 128>}, {pipeline_mode = #tpu.pipeline_mode<synchronous>, transform_indices = @transform_8, window_bounds = array<i64: 1, 128>}, {pipeline_mode = #tpu.pipeline_mode<synchronous>, transform_indices = @transform_9, window_bounds = array<i64: 128, 128>}, {pipeline_mode = #tpu.pipeline_mode<synchronous>, transform_indices = @transform_10, window_bounds = array<i64: 1, 128>}, {transform_indices = @transform_11, window_bounds = array<i64: 8, 128>}]} {
    %c0 = arith.constant 0 : index
    %c0_0 = arith.constant 0 : index
    %0 = vector.load %arg1[%c0, %c0_0] : memref<8x32xf32, #tpu.memory_space<vmem>>, vector<8x32xf32>
    %c0_1 = arith.constant 0 : index
    %c0_2 = arith.constant 0 : index
    %1 = vector.load %arg2[%c0_1, %c0_2] : memref<32x128xf32, #tpu.memory_space<vmem>>, vector<32x128xf32>
    %cst = arith.constant dense<0.000000e+00> : vector<8x128xf32>
    %2 = tpu.matmul %0, %1, %cst {dimension_numbers = #tpu.dot_dimension_numbers<[1], [0], [0], [1], [0, 0, 1, 1], [], []>} : vector<8x32xf32>, vector<32x128xf32>, vector<8x128xf32> -> vector<8x128xf32>
    %c0_3 = arith.constant 0 : index
    %c0_4 = arith.constant 0 : index
    %3 = vector.load %arg3[%c0_3, %c0_4] : memref<1x128xf32, #tpu.memory_space<vmem>>, vector<1x128xf32>
    %4 = vector.broadcast %3 : vector<1x128xf32> to vector<8x128xf32>
    %5 = arith.addf %2, %4 : vector<8x128xf32>
    %cst_5 = arith.constant dense<0.000000e+00> : vector<8xf32>
    %6 = vector.multi_reduction <add>, %5, %cst_5 [1] : vector<8x128xf32> to vector<8xf32>
    %7 = vector.shape_cast %6 : vector<8xf32> to vector<8x1xf32>
    %8 = arith.mulf %5, %5 : vector<8x128xf32>
    %cst_6 = arith.constant dense<0.000000e+00> : vector<8xf32>
    %9 = vector.multi_reduction <add>, %8, %cst_6 [1] : vector<8x128xf32> to vector<8xf32>
    %10 = vector.shape_cast %9 : vector<8xf32> to vector<8x1xf32>
    %cst_7 = arith.constant 3.125000e-02 : f32
    %11 = vector.broadcast %cst_7 : f32 to vector<8x1xf32>
    %12 = arith.mulf %7, %11 : vector<8x1xf32>
    %cst_8 = arith.constant 3.125000e-02 : f32
    %13 = vector.broadcast %cst_8 : f32 to vector<8x1xf32>
    %14 = arith.mulf %10, %13 : vector<8x1xf32>
    %15 = arith.mulf %12, %12 : vector<8x1xf32>
    %16 = arith.subf %14, %15 : vector<8x1xf32>
    %cst_9 = arith.constant 0.000000e+00 : f32
    %17 = vector.broadcast %cst_9 : f32 to vector<8x1xf32>
    %18 = arith.maximumf %16, %17 : vector<8x1xf32>
    %19 = vector.broadcast %12 : vector<8x1xf32> to vector<8x128xf32>
    %20 = arith.subf %5, %19 : vector<8x128xf32>
    %cst_10 = arith.constant 9.99999974E-6 : f32
    %21 = vector.broadcast %cst_10 : f32 to vector<8x1xf32>
    %22 = arith.addf %18, %21 : vector<8x1xf32>
    %23 = math.rsqrt %22 : vector<8x1xf32>
    %24 = vector.broadcast %23 : vector<8x1xf32> to vector<8x128xf32>
    %25 = arith.mulf %20, %24 : vector<8x128xf32>
    %c0_11 = arith.constant 0 : index
    %c0_12 = arith.constant 0 : index
    %26 = vector.load %arg4[%c0_11, %c0_12] : memref<1x128xf32, #tpu.memory_space<vmem>>, vector<1x128xf32>
    %27 = vector.broadcast %26 : vector<1x128xf32> to vector<8x128xf32>
    %28 = arith.mulf %25, %27 : vector<8x128xf32>
    %c0_13 = arith.constant 0 : index
    %c0_14 = arith.constant 0 : index
    %29 = vector.load %arg5[%c0_13, %c0_14] : memref<1x128xf32, #tpu.memory_space<vmem>>, vector<1x128xf32>
    %30 = vector.broadcast %29 : vector<1x128xf32> to vector<8x128xf32>
    %31 = arith.addf %28, %30 : vector<8x128xf32>
    %32 = math.tanh %31 : vector<8x128xf32>
    %c0_15 = arith.constant 0 : index
    %c0_16 = arith.constant 0 : index
    %33 = vector.load %arg6[%c0_15, %c0_16] : memref<128x128xf32, #tpu.memory_space<vmem>>, vector<128x128xf32>
    %cst_17 = arith.constant dense<0.000000e+00> : vector<8x128xf32>
    %34 = tpu.matmul %32, %33, %cst_17 {dimension_numbers = #tpu.dot_dimension_numbers<[1], [0], [0], [1], [0, 0, 1, 1], [], []>} : vector<8x128xf32>, vector<128x128xf32>, vector<8x128xf32> -> vector<8x128xf32>
    %c0_18 = arith.constant 0 : index
    %c0_19 = arith.constant 0 : index
    %35 = vector.load %arg7[%c0_18, %c0_19] : memref<1x128xf32, #tpu.memory_space<vmem>>, vector<1x128xf32>
    %36 = vector.broadcast %35 : vector<1x128xf32> to vector<8x128xf32>
    %37 = arith.addf %34, %36 : vector<8x128xf32>
    %cst_20 = arith.constant 0.000000e+00 : f32
    %38 = vector.broadcast %cst_20 : f32 to vector<8x128xf32>
    %39 = arith.maximumf %37, %38 : vector<8x128xf32>
    %c0_21 = arith.constant 0 : index
    %c0_22 = arith.constant 0 : index
    %40 = vector.load %arg8[%c0_21, %c0_22] : memref<128x128xf32, #tpu.memory_space<vmem>>, vector<128x128xf32>
    %cst_23 = arith.constant dense<0.000000e+00> : vector<8x128xf32>
    %41 = tpu.matmul %39, %40, %cst_23 {dimension_numbers = #tpu.dot_dimension_numbers<[1], [0], [0], [1], [0, 0, 1, 1], [], []>} : vector<8x128xf32>, vector<128x128xf32>, vector<8x128xf32> -> vector<8x128xf32>
    %c0_24 = arith.constant 0 : index
    %c0_25 = arith.constant 0 : index
    %42 = vector.load %arg9[%c0_24, %c0_25] : memref<1x128xf32, #tpu.memory_space<vmem>>, vector<1x128xf32>
    %43 = vector.broadcast %42 : vector<1x128xf32> to vector<8x128xf32>
    %44 = arith.addf %41, %43 : vector<8x128xf32>
    %cst_26 = arith.constant 0.000000e+00 : f32
    %45 = vector.broadcast %cst_26 : f32 to vector<8x128xf32>
    %46 = arith.maximumf %44, %45 : vector<8x128xf32>
    %c0_27 = arith.constant 0 : index
    %c0_28 = arith.constant 0 : index
    %47 = vector.load %arg10[%c0_27, %c0_28] : memref<128x128xf32, #tpu.memory_space<vmem>>, vector<128x128xf32>
    %cst_29 = arith.constant dense<0.000000e+00> : vector<8x128xf32>
    %48 = tpu.matmul %46, %47, %cst_29 {dimension_numbers = #tpu.dot_dimension_numbers<[1], [0], [0], [1], [0, 0, 1, 1], [], []>} : vector<8x128xf32>, vector<128x128xf32>, vector<8x128xf32> -> vector<8x128xf32>
    %c0_30 = arith.constant 0 : index
    %c0_31 = arith.constant 0 : index
    %49 = vector.load %arg11[%c0_30, %c0_31] : memref<1x128xf32, #tpu.memory_space<vmem>>, vector<1x128xf32>
    %50 = vector.broadcast %49 : vector<1x128xf32> to vector<8x128xf32>
    %51 = arith.addf %48, %50 : vector<8x128xf32>
    %52 = math.tanh %51 : vector<8x128xf32>
    %c0_32 = arith.constant 0 : index
    %c0_33 = arith.constant 0 : index
    %53 = vector.load %arg12[%c0_32, %c0_33] : memref<8x128xf32, #tpu.memory_space<vmem>>, vector<8x128xf32>
    tpu.vector_store %arg12[%c0_32, %c0_33], %52 {strides = array<i32>} : memref<8x128xf32, #tpu.memory_space<vmem>>, vector<8x128xf32>,
    return
  }
  func.func @transform_0(%arg0: i32) -> (i32, i32) {
    %c0_i32 = arith.constant 0 : i32
    %c0_i32_0 = arith.constant 0 : i32
    return %arg0, %c0_i32 : i32, i32
  }
  func.func @transform_1(%arg0: i32) -> (i32, i32) {
    %c0_i32 = arith.constant 0 : i32
    %c0_i32_0 = arith.constant 0 : i32
    %c0_i32_1 = arith.constant 0 : i32
    return %c0_i32, %c0_i32_0 : i32, i32
  }
  func.func @transform_2(%arg0: i32) -> (i32, i32) {
    %c0_i32 = arith.constant 0 : i32
    %c0_i32_0 = arith.constant 0 : i32
    %c0_i32_1 = arith.constant 0 : i32
    return %c0_i32, %c0_i32_0 : i32, i32
  }
  func.func @transform_3(%arg0: i32) -> (i32, i32) {
    %c0_i32 = arith.constant 0 : i32
    %c0_i32_0 = arith.constant 0 : i32
    %c0_i32_1 = arith.constant 0 : i32
    return %c0_i32, %c0_i32_0 : i32, i32
  }
  func.func @transform_4(%arg0: i32) -> (i32, i32) {
    %c0_i32 = arith.constant 0 : i32
    %c0_i32_0 = arith.constant 0 : i32
    %c0_i32_1 = arith.constant 0 : i32
    return %c0_i32, %c0_i32_0 : i32, i32
  }
  func.func @transform_5(%arg0: i32) -> (i32, i32) {
    %c0_i32 = arith.constant 0 : i32
    %c0_i32_0 = arith.constant 0 : i32
    %c0_i32_1 = arith.constant 0 : i32
    return %c0_i32, %c0_i32_0 : i32, i32
  }
  func.func @transform_6(%arg0: i32) -> (i32, i32) {
    %c0_i32 = arith.constant 0 : i32
    %c0_i32_0 = arith.constant 0 : i32
    %c0_i32_1 = arith.constant 0 : i32
    return %c0_i32, %c0_i32_0 : i32, i32
  }
  func.func @transform_7(%arg0: i32) -> (i32, i32) {
    %c0_i32 = arith.constant 0 : i32
    %c0_i32_0 = arith.constant 0 : i32
    %c0_i32_1 = arith.constant 0 : i32
    return %c0_i32, %c0_i32_0 : i32, i32
  }
  func.func @transform_8(%arg0: i32) -> (i32, i32) {
    %c0_i32 = arith.constant 0 : i32
    %c0_i32_0 = arith.constant 0 : i32
    %c0_i32_1 = arith.constant 0 : i32
    return %c0_i32, %c0_i32_0 : i32, i32
  }
  func.func @transform_9(%arg0: i32) -> (i32, i32) {
    %c0_i32 = arith.constant 0 : i32
    %c0_i32_0 = arith.constant 0 : i32
    %c0_i32_1 = arith.constant 0 : i32
    return %c0_i32, %c0_i32_0 : i32, i32
  }
  func.func @transform_10(%arg0: i32) -> (i32, i32) {
    %c0_i32 = arith.constant 0 : i32
    %c0_i32_0 = arith.constant 0 : i32
    %c0_i32_1 = arith.constant 0 : i32
    return %c0_i32, %c0_i32_0 : i32, i32
  }
  func.func @transform_11(%arg0: i32) -> (i32, i32) {
    %c0_i32 = arith.constant 0 : i32
    %c0_i32_0 = arith.constant 0 : i32
    return %arg0, %c0_i32 : i32, i32
  }
}

module attributes {stable_mosaic.version = 11 : i64} {
  func.func @actor_kernel(%arg0: i32, %arg1: memref<8x32xf32, #tpu.memory_space<vmem>>, %arg2: memref<32x128xf32, #tpu.memory_space<vmem>>, %arg3: memref<1x128xf32, #tpu.memory_space<vmem>>, %arg4: memref<1x128xf32, #tpu.memory_space<vmem>>, %arg5: memref<1x128xf32, #tpu.memory_space<vmem>>, %arg6: memref<128x128xf32, #tpu.memory_space<vmem>>, %arg7: memref<1x128xf32, #tpu.memory_space<vmem>>, %arg8: memref<128x128xf32, #tpu.memory_space<vmem>>, %arg9: memref<1x128xf32, #tpu.memory_space<vmem>>, %arg10: memref<128x128xf32, #tpu.memory_space<vmem>>, %arg11: memref<1x128xf32, #tpu.memory_space<vmem>>, %arg12: memref<8x128xf32, #tpu.memory_space<vmem>>) attributes {dimension_semantics = [#tpu.dimension_semantics<parallel>], iteration_bounds = array<i64: 2>, scalar_prefetch = 0 : i64, scratch_operands = 0 : i64, tpu.core_type = #tpu.core_type<tc>, window_params = [{transform_indices = @transform_0, window_bounds = array<i64: 8, 32>}, {pipeline_mode = #tpu.pipeline_mode<synchronous>, transform_indices = @transform_1, window_bounds = array<i64: 32, 128>}, {pipeline_mode = #tpu.pipeline_mode<synchronous>, transform_indices = @transform_2, window_bounds = array<i64: 1, 128>}, {pipeline_mode = #tpu.pipeline_mode<synchronous>, transform_indices = @transform_3, window_bounds = array<i64: 1, 128>}, {pipeline_mode = #tpu.pipeline_mode<synchronous>, transform_indices = @transform_4, window_bounds = array<i64: 1, 128>}, {pipeline_mode = #tpu.pipeline_mode<synchronous>, transform_indices = @transform_5, window_bounds = array<i64: 128, 128>}, {pipeline_mode = #tpu.pipeline_mode<synchronous>, transform_indices = @transform_6, window_bounds = array<i64: 1, 128>}, {pipeline_mode = #tpu.pipeline_mode<synchronous>, transform_indices = @transform_7, window_bounds = array<i64: 128, 128>}, {pipeline_mode = #tpu.pipeline_mode<synchronous>, transform_indices = @transform_8, window_bounds = array<i64: 1, 128>}, {pipeline_mode = #tpu.pipeline_mode<synchronous>, transform_indices = @transform_9, window_bounds = array<i64: 128, 128>}, {pipeline_mode = #tpu.pipeline_mode<synchronous>, transform_indices = @transform_10, window_bounds = array<i64: 1, 128>}, {transform_indices = @transform_11, window_bounds = array<i64: 8, 128>}]} {
    %c0 = arith.constant 0 : index
    %c0_0 = arith.constant 0 : index
    %0 = vector.load %arg1[%c0, %c0_0] : memref<8x32xf32, #tpu.memory_space<vmem>>, vector<8x32xf32>
    %c0_1 = arith.constant 0 : index
    %c0_2 = arith.constant 0 : index
    %1 = vector.load %arg2[%c0_1, %c0_2] : memref<32x128xf32, #tpu.memory_space<vmem>>, vector<32x128xf32>
    %cst = arith.constant dense<0.000000e+00> : vector<8x128xf32>
    %2 = tpu.matmul %0, %1, %cst {dimension_numbers = #tpu.dot_dimension_numbers<[1], [0], [0], [1], [0, 0, 1, 1], [], []>} : vector<8x32xf32>, vector<32x128xf32>, vector<8x128xf32> -> vector<8x128xf32>
    %c0_3 = arith.constant 0 : index
    %c0_4 = arith.constant 0 : index
    %3 = vector.load %arg3[%c0_3, %c0_4] : memref<1x128xf32, #tpu.memory_space<vmem>>, vector<1x128xf32>
    %4 = vector.broadcast %3 : vector<1x128xf32> to vector<8x128xf32>
    %5 = arith.addf %2, %4 : vector<8x128xf32>
    %cst_5 = arith.constant dense<0.000000e+00> : vector<8xf32>
    %6 = vector.multi_reduction <add>, %5, %cst_5 [1] : vector<8x128xf32> to vector<8xf32>
    %7 = vector.shape_cast %6 : vector<8xf32> to vector<8x1xf32>
    %8 = arith.mulf %5, %5 : vector<8x128xf32>
    %cst_6 = arith.constant dense<0.000000e+00> : vector<8xf32>
    %9 = vector.multi_reduction <add>, %8, %cst_6 [1] : vector<8x128xf32> to vector<8xf32>
    %10 = vector.shape_cast %9 : vector<8xf32> to vector<8x1xf32>
    %cst_7 = arith.constant 3.125000e-02 : f32
    %11 = vector.broadcast %cst_7 : f32 to vector<8x1xf32>
    %12 = arith.mulf %7, %11 : vector<8x1xf32>
    %cst_8 = arith.constant 3.125000e-02 : f32
    %13 = vector.broadcast %cst_8 : f32 to vector<8x1xf32>
    %14 = arith.mulf %10, %13 : vector<8x1xf32>
    %15 = arith.mulf %12, %12 : vector<8x1xf32>
    %16 = arith.subf %14, %15 : vector<8x1xf32>
    %cst_9 = arith.constant 0.000000e+00 : f32
    %17 = vector.broadcast %cst_9 : f32 to vector<8x1xf32>
    %18 = arith.maximumf %16, %17 : vector<8x1xf32>
    %19 = vector.broadcast %12 : vector<8x1xf32> to vector<8x128xf32>
    %20 = arith.subf %5, %19 : vector<8x128xf32>
    %cst_10 = arith.constant 9.99999974E-6 : f32
    %21 = vector.broadcast %cst_10 : f32 to vector<8x1xf32>
    %22 = arith.addf %18, %21 : vector<8x1xf32>
    %23 = math.rsqrt %22 : vector<8x1xf32>
    %24 = vector.broadcast %23 : vector<8x1xf32> to vector<8x128xf32>
    %25 = arith.mulf %20, %24 : vector<8x128xf32>
    %c0_11 = arith.constant 0 : index
    %c0_12 = arith.constant 0 : index
    %26 = vector.load %arg4[%c0_11, %c0_12] : memref<1x128xf32, #tpu.memory_space<vmem>>, vector<1x128xf32>
    %27 = vector.broadcast %26 : vector<1x128xf32> to vector<8x128xf32>
    %28 = arith.mulf %25, %27 : vector<8x128xf32>
    %c0_13 = arith.constant 0 : index
    %c0_14 = arith.constant 0 : index
    %29 = vector.load %arg5[%c0_13, %c0_14] : memref<1x128xf32, #tpu.memory_space<vmem>>, vector<1x128xf32>
    %30 = vector.broadcast %29 : vector<1x128xf32> to vector<8x128xf32>
    %31 = arith.addf %28, %30 : vector<8x128xf32>
    %32 = math.tanh %31 : vector<8x128xf32>
    %c0_15 = arith.constant 0 : index
    %c0_16 = arith.constant 0 : index
    %33 = vector.load %arg6[%c0_15, %c0_16] : memref<128x128xf32, #tpu.memory_space<vmem>>, vector<128x128xf32>
    %cst_17 = arith.constant dense<0.000000e+00> : vector<8x128xf32>
    %34 = tpu.matmul %32, %33, %cst_17 {dimension_numbers = #tpu.dot_dimension_numbers<[1], [0], [0], [1], [0, 0, 1, 1], [], []>} : vector<8x128xf32>, vector<128x128xf32>, vector<8x128xf32> -> vector<8x128xf32>
    %c0_18 = arith.constant 0 : index
    %c0_19 = arith.constant 0 : index
    %35 = vector.load %arg7[%c0_18, %c0_19] : memref<1x128xf32, #tpu.memory_space<vmem>>, vector<1x128xf32>
    %36 = vector.broadcast %35 : vector<1x128xf32> to vector<8x128xf32>
    %37 = arith.addf %34, %36 : vector<8x128xf32>
    %cst_20 = arith.constant 0.000000e+00 : f32
    %38 = vector.broadcast %cst_20 : f32 to vector<8x128xf32>
    %39 = arith.maximumf %37, %38 : vector<8x128xf32>
    %c0_21 = arith.constant 0 : index
    %c0_22 = arith.constant 0 : index
    %40 = vector.load %arg8[%c0_21, %c0_22] : memref<128x128xf32, #tpu.memory_space<vmem>>, vector<128x128xf32>
    %cst_23 = arith.constant dense<0.000000e+00> : vector<8x128xf32>
    %41 = tpu.matmul %39, %40, %cst_23 {dimension_numbers = #tpu.dot_dimension_numbers<[1], [0], [0], [1], [0, 0, 1, 1], [], []>} : vector<8x128xf32>, vector<128x128xf32>, vector<8x128xf32> -> vector<8x128xf32>
    %c0_24 = arith.constant 0 : index
    %c0_25 = arith.constant 0 : index
    %42 = vector.load %arg9[%c0_24, %c0_25] : memref<1x128xf32, #tpu.memory_space<vmem>>, vector<1x128xf32>
    %43 = vector.broadcast %42 : vector<1x128xf32> to vector<8x128xf32>
    %44 = arith.addf %41, %43 : vector<8x128xf32>
    %cst_26 = arith.constant 0.000000e+00 : f32
    %45 = vector.broadcast %cst_26 : f32 to vector<8x128xf32>
    %46 = arith.maximumf %44, %45 : vector<8x128xf32>
    %c0_27 = arith.constant 0 : index
    %c0_28 = arith.constant 0 : index
    %47 = vector.load %arg10[%c0_27, %c0_28] : memref<128x128xf32, #tpu.memory_space<vmem>>, vector<128x128xf32>
    %cst_29 = arith.constant dense<0.000000e+00> : vector<8x128xf32>
    %48 = tpu.matmul %46, %47, %cst_29 {dimension_numbers = #tpu.dot_dimension_numbers<[1], [0], [0], [1], [0, 0, 1, 1], [], []>} : vector<8x128xf32>, vector<128x128xf32>, vector<8x128xf32> -> vector<8x128xf32>
    %c0_30 = arith.constant 0 : index
    %c0_31 = arith.constant 0 : index
    %49 = vector.load %arg11[%c0_30, %c0_31] : memref<1x128xf32, #tpu.memory_space<vmem>>, vector<1x128xf32>
    %50 = vector.broadcast %49 : vector<1x128xf32> to vector<8x128xf32>
    %51 = arith.addf %48, %50 : vector<8x128xf32>
    %52 = math.tanh %51 : vector<8x128xf32>
    %c0_32 = arith.constant 0 : index
    %c0_33 = arith.constant 0 : index
    %53 = vector.load %arg12[%c0_32, %c0_33] : memref<8x128xf32, #tpu.memory_space<vmem>>, vector<8x128xf32>
    tpu.vector_store %arg12[%c0_32, %c0_33], %52 {strides = array<i32>} : memref<8x128xf32, #tpu.memory_space<vmem>>, vector<8x128xf32>,
    return
  }
  func.func @transform_0(%arg0: i32) -> (i32, i32) {
    %c0_i32 = arith.constant 0 : i32
    %c0_i32_0 = arith.constant 0 : i32
    return %arg0, %c0_i32 : i32, i32
  }
  func.func @transform_1(%arg0: i32) -> (i32, i32) {
    %c0_i32 = arith.constant 0 : i32
    %c0_i32_0 = arith.constant 0 : i32
    %c0_i32_1 = arith.constant 0 : i32
    return %c0_i32, %c0_i32_0 : i32, i32
  }
  func.func @transform_2(%arg0: i32) -> (i32, i32) {
    %c0_i32 = arith.constant 0 : i32
    %c0_i32_0 = arith.constant 0 : i32
    %c0_i32_1 = arith.constant 0 : i32
    return %c0_i32, %c0_i32_0 : i32, i32
  }
  func.func @transform_3(%arg0: i32) -> (i32, i32) {
    %c0_i32 = arith.constant 0 : i32
    %c0_i32_0 = arith.constant 0 : i32
    %c0_i32_1 = arith.constant 0 : i32
    return %c0_i32, %c0_i32_0 : i32, i32
  }
  func.func @transform_4(%arg0: i32) -> (i32, i32) {
    %c0_i32 = arith.constant 0 : i32
    %c0_i32_0 = arith.constant 0 : i32
    %c0_i32_1 = arith.constant 0 : i32
    return %c0_i32, %c0_i32_0 : i32, i32
  }
  func.func @transform_5(%arg0: i32) -> (i32, i32) {
    %c0_i32 = arith.constant 0 : i32
    %c0_i32_0 = arith.constant 0 : i32
    %c0_i32_1 = arith.constant 0 : i32
    return %c0_i32, %c0_i32_0 : i32, i32
  }
  func.func @transform_6(%arg0: i32) -> (i32, i32) {
    %c0_i32 = arith.constant 0 : i32
    %c0_i32_0 = arith.constant 0 : i32
    %c0_i32_1 = arith.constant 0 : i32
    return %c0_i32, %c0_i32_0 : i32, i32
  }
  func.func @transform_7(%arg0: i32) -> (i32, i32) {
    %c0_i32 = arith.constant 0 : i32
    %c0_i32_0 = arith.constant 0 : i32
    %c0_i32_1 = arith.constant 0 : i32
    return %c0_i32, %c0_i32_0 : i32, i32
  }
  func.func @transform_8(%arg0: i32) -> (i32, i32) {
    %c0_i32 = arith.constant 0 : i32
    %c0_i32_0 = arith.constant 0 : i32
    %c0_i32_1 = arith.constant 0 : i32
    return %c0_i32, %c0_i32_0 : i32, i32
  }
  func.func @transform_9(%arg0: i32) -> (i32, i32) {
    %c0_i32 = arith.constant 0 : i32
    %c0_i32_0 = arith.constant 0 : i32
    %c0_i32_1 = arith.constant 0 : i32
    return %c0_i32, %c0_i32_0 : i32, i32
  }
  func.func @transform_10(%arg0: i32) -> (i32, i32) {
    %c0_i32 = arith.constant 0 : i32
    %c0_i32_0 = arith.constant 0 : i32
    %c0_i32_1 = arith.constant 0 : i32
    return %c0_i32, %c0_i32_0 : i32, i32
  }
  func.func @transform_11(%arg0: i32) -> (i32, i32) {
    %c0_i32 = arith.constant 0 : i32
    %c0_i32_0 = arith.constant 0 : i32
    return %arg0, %c0_i32 : i32, i32
  }
}

</mosaic_0001>

<llo_original>
// kernel: tpu_custom_call.1
$region0: #{tpu_custom_call.1}
  #allocation0 [shape = 'u32[]', space=smem, size = 0x4, offset = 0x4, fixed_abs, tag = 'smem constant byte address 0x4 - core index']
  #allocation1 [shape = 'u32[144,128]{1,0:T(1,128)}', space=vmem, size = 0x12000, scoped, tag = 'internal scratch']
  %s0 = inlined_call_operand.hbm [shape: f32[16,32], index: 0, kind: input, shape index: {}]
  %s1 = inlined_call_operand.hbm [shape: f32[32,128], index: 1, kind: input, shape index: {}]
  %s2 = inlined_call_operand.vmem [shape: f32[1,128], index: 2, kind: input, shape index: {}]
  %s3 = inlined_call_operand.vmem [shape: f32[1,128], index: 3, kind: input, shape index: {}]
  %s4 = inlined_call_operand.vmem [shape: f32[1,128], index: 4, kind: input, shape index: {}]
  %s5 = inlined_call_operand.hbm [shape: f32[128,128], index: 5, kind: input, shape index: {}]
  %s6 = inlined_call_operand.vmem [shape: f32[1,128], index: 6, kind: input, shape index: {}]
  %s7 = inlined_call_operand.hbm [shape: f32[128,128], index: 7, kind: input, shape index: {}]
  %s8 = inlined_call_operand.vmem [shape: f32[1,128], index: 8, kind: input, shape index: {}]
  %s9 = inlined_call_operand.hbm [shape: f32[128,128], index: 9, kind: input, shape index: {}]
  %s10 = inlined_call_operand.vmem [shape: f32[1,128], index: 10, kind: input, shape index: {}]
  %s11 = inlined_call_operand.hbm [shape: f32[16,128], index: 11, kind: output, shape index: {}]
  %s12 = sld [smem:[#allocation0]]
  $region97: #{tpu_custom_call.1} parent=0
    _
  %s14 = ssub.s32 1, %s12
  %s15 = scalar_select 0, %s14, %s12
  $region1: #{tpu_custom_call.1} parent=0
    #allocation2 [shape = 'u8[8192]{0}', space=vmem, size = 0x2000, scoped, tag = 'input window, operand 0']
    #allocation3 [shape = 's32[2]{0}', space=sflag, size = 0x8, scoped, tag = 'scoped memory for tpu_custom_call.1']
    #allocation4 [shape = 's32[2]{0}', space=sflag, size = 0x8, scoped, tag = 'scoped memory for tpu_custom_call.1']
    #allocation5 [shape = 'u8[16384]{0}', space=vmem, size = 0x4000, scoped, tag = 'input window, operand 1, single buffered']
    #allocation6 [shape = 's32[1]{0}', space=sflag, size = 0x4, scoped, tag = 'scoped memory for tpu_custom_call.1']
    #allocation7 [shape = 'u8[65536]{0}', space=vmem, size = 0x10000, scoped, tag = 'input window, operand 5, single buffered']
    #allocation8 [shape = 'u8[65536]{0}', space=vmem, size = 0x10000, scoped, tag = 'input window, operand 7, single buffered']
    #allocation9 [shape = 's32[1]{0}', space=sflag, size = 0x4, scoped, tag = 'scoped memory for tpu_custom_call.1']
    #allocation10 [shape = 'u8[65536]{0}', space=vmem, size = 0x10000, scoped, tag = 'input window, operand 9, single buffered']
    #allocation11 [shape = 'u8[8192]{0}', space=vmem, size = 0x2000, scoped, tag = 'output window, operand 0']
    %16 = vsyncpa [#allocation3], 0
    %s17 = scalar_lea.sflag [#allocation3], 1
    %18 = vsyncpa %s17, 0
    %19 = vsyncpa [#allocation6], 0
    %20 = vsyncpa [#allocation9], 0
    %21 = vsyncpa [#allocation4], 0
    %s22 = scalar_lea.sflag [#allocation4], 1
    %23 = vsyncpa %s22, 0
    loop: start=0, step=1, limit=4
    $region2: #{tpu_custom_call.1} parent=1 // loop_pre_header
      _
    $region3: #{tpu_custom_call.1} parent=1 // loop_header
      %s25 = sphi 0, %s29
      %p26 = scmp.ge.s32.totalorder %s25, 4
      %s35 = sphi 0, %s37
      %s38 = sphi 0, %s35
      %s39 = sphi 0, %s38
      %s55 = sphi 0, %s39
      %s59 = sphi 0, %s59
      %s61 = sphi 0, %s59
      %s62 = sphi 0, %s61
      %s76 = sphi 0, %s62
      %s80 = sphi 0, %s80
      %s82 = sphi 0, %s80
      %s83 = sphi 0, %s82
      %s97 = sphi 0, %s83
      %s101 = sphi 0, %s101
      %s103 = sphi 0, %s101
      %s104 = sphi 0, %s103
      %s118 = sphi 0, %s104
      %s122 = sphi 0, %s122
      %s124 = sphi 0, %s122
      %s125 = sphi 0, %s124
      %s139 = sphi 0, %s125
      %s143 = sphi 0, %s143
      %s145 = sphi 0, %s143
      %s146 = sphi 0, %s145
      %s160 = sphi 0, %s146
      %s164 = sphi 0, %s164
      %s166 = sphi 0, %s164
      %s167 = sphi 0, %s166
      %s181 = sphi 0, %s167
      %s185 = sphi 0, %s185
      %s187 = sphi 0, %s185
      %s188 = sphi 0, %s187
      %s202 = sphi 0, %s188
      %s206 = sphi 0, %s206
      %s208 = sphi 0, %s206
      %s209 = sphi 0, %s208
      %s223 = sphi 0, %s209
      %s227 = sphi 0, %s227
      %s229 = sphi 0, %s227
      %s230 = sphi 0, %s229
      %s244 = sphi 0, %s230
      %s248 = sphi 0, %s248
      %s250 = sphi 0, %s248
      %s251 = sphi 0, %s250
      %s265 = sphi 0, %s251
      %s271 = sphi 0, %s273
      %s274 = sphi 0, %s271
      %s275 = sphi 0, %s274
      %s291 = sphi 0, %s275
    $region4: #{tpu_custom_call.1} parent=1 // loop_header_branch
      %28 = sbr.rel (%p26) target = $region8
    $region5: #{tpu_custom_call.1} parent=1 // loop_body
      %s30 = ssub.s32 %s25, 1
      %s31 = ssub.s32 %s25, 2
      %s32 = sadd.s32 %s25, 1
      %s33 = ssub.s32 %s25, %s32
      %p34 = scmp.eq.s32.totalorder %s33, 0
      %s36 = sadd.s32 %s35, 1
      %s37 = scalar_select %p34, %s35, %s36
      %p40 = pneg %p34
      %p41 = scmp.eq.s32.totalorder %s25, 1
      %p42 = por %p40, %p41
      %p43 = scmp.ne.s32.totalorder %s35, %s38
      %p44 = scmp.eq.s32.totalorder %s25, 0
      %p45 = por %p43, %p44
      %p46 = scmp.ne.s32.totalorder %s35, %s38
      %p47 = scmp.eq.s32.totalorder %s30, 1
      %p48 = por %p46, %p47
      %p49 = scmp.ne.s32.totalorder %s38, %s39
      %p50 = scmp.eq.s32.totalorder %s30, 0
      %p51 = por %p49, %p50
      %p52 = scmp.ne.s32.totalorder %s38, %s39
      %p53 = scmp.eq.s32.totalorder %s31, 1
      %p54 = por %p52, %p53
      %p56 = scmp.ne.s32.totalorder %s39, %s55
      %p57 = scmp.eq.s32.totalorder %s31, 0
      %p58 = por %p56, %p57
      %s60 = sadd.s32 %s59, 1
      %p63 = scmp.eq.s32.totalorder %s25, 1
      %p64 = scmp.ne.s32.totalorder %s59, %s61
      %p65 = scmp.eq.s32.totalorder %s25, 0
      %p66 = por %p64, %p65
      %p67 = scmp.ne.s32.totalorder %s59, %s61
      %p68 = scmp.eq.s32.totalorder %s30, 1
      %p69 = por %p67, %p68
      %p70 = scmp.ne.s32.totalorder %s61, %s62
      %p71 = scmp.eq.s32.totalorder %s30, 0
      %p72 = por %p70, %p71
      %p73 = scmp.ne.s32.totalorder %s61, %s62
      %p74 = scmp.eq.s32.totalorder %s31, 1
      %p75 = por %p73, %p74
      %p77 = scmp.ne.s32.totalorder %s62, %s76
      %p78 = scmp.eq.s32.totalorder %s31, 0
      %p79 = por %p77, %p78
      %s81 = sadd.s32 %s80, 1
      %p84 = scmp.eq.s32.totalorder %s25, 1
      %p85 = scmp.ne.s32.totalorder %s80, %s82
      %p86 = scmp.eq.s32.totalorder %s25, 0
      %p87 = por %p85, %p86
      %p88 = scmp.ne.s32.totalorder %s80, %s82
      %p89 = scmp.eq.s32.totalorder %s30, 1
      %p90 = por %p88, %p89
      %p91 = scmp.ne.s32.totalorder %s82, %s83
      %p92 = scmp.eq.s32.totalorder %s30, 0
      %p93 = por %p91, %p92
      %p94 = scmp.ne.s32.totalorder %s82, %s83
      %p95 = scmp.eq.s32.totalorder %s31, 1
      %p96 = por %p94, %p95
      %p98 = scmp.ne.s32.totalorder %s83, %s97
      %p99 = scmp.eq.s32.totalorder %s31, 0
      %p100 = por %p98, %p99
      %s102 = sadd.s32 %s101, 1
      %p105 = scmp.eq.s32.totalorder %s25, 1
      %p106 = scmp.ne.s32.totalorder %s101, %s103
      %p107 = scmp.eq.s32.totalorder %s25, 0
      %p108 = por %p106, %p107
      %p109 = scmp.ne.s32.totalorder %s101, %s103
      %p110 = scmp.eq.s32.totalorder %s30, 1
      %p111 = por %p109, %p110
      %p112 = scmp.ne.s32.totalorder %s103, %s104
      %p113 = scmp.eq.s32.totalorder %s30, 0
      %p114 = por %p112, %p113
      %p115 = scmp.ne.s32.totalorder %s103, %s104
      %p116 = scmp.eq.s32.totalorder %s31, 1
      %p117 = por %p115, %p116
      %p119 = scmp.ne.s32.totalorder %s104, %s118
      %p120 = scmp.eq.s32.totalorder %s31, 0
      %p121 = por %p119, %p120
      %s123 = sadd.s32 %s122, 1
      %p126 = scmp.eq.s32.totalorder %s25, 1
      %p127 = scmp.ne.s32.totalorder %s122, %s124
      %p128 = scmp.eq.s32.totalorder %s25, 0
      %p129 = por %p127, %p128
      %p130 = scmp.ne.s32.totalorder %s122, %s124
      %p131 = scmp.eq.s32.totalorder %s30, 1
      %p132 = por %p130, %p131
      %p133 = scmp.ne.s32.totalorder %s124, %s125
      %p134 = scmp.eq.s32.totalorder %s30, 0
      %p135 = por %p133, %p134
      %p136 = scmp.ne.s32.totalorder %s124, %s125
      %p137 = scmp.eq.s32.totalorder %s31, 1
      %p138 = por %p136, %p137
      %p140 = scmp.ne.s32.totalorder %s125, %s139
      %p141 = scmp.eq.s32.totalorder %s31, 0
      %p142 = por %p140, %p141
      %s144 = sadd.s32 %s143, 1
      %p147 = scmp.eq.s32.totalorder %s25, 1
      %p148 = scmp.ne.s32.totalorder %s143, %s145
      %p149 = scmp.eq.s32.totalorder %s25, 0
      %p150 = por %p148, %p149
      %p151 = scmp.ne.s32.totalorder %s143, %s145
      %p152 = scmp.eq.s32.totalorder %s30, 1
      %p153 = por %p151, %p152
      %p154 = scmp.ne.s32.totalorder %s145, %s146
      %p155 = scmp.eq.s32.totalorder %s30, 0
      %p156 = por %p154, %p155
      %p157 = scmp.ne.s32.totalorder %s145, %s146
      %p158 = scmp.eq.s32.totalorder %s31, 1
      %p159 = por %p157, %p158
      %p161 = scmp.ne.s32.totalorder %s146, %s160
      %p162 = scmp.eq.s32.totalorder %s31, 0
      %p163 = por %p161, %p162
      %s165 = sadd.s32 %s164, 1
      %p168 = scmp.eq.s32.totalorder %s25, 1
      %p169 = scmp.ne.s32.totalorder %s164, %s166
      %p170 = scmp.eq.s32.totalorder %s25, 0
      %p171 = por %p169, %p170
      %p172 = scmp.ne.s32.totalorder %s164, %s166
      %p173 = scmp.eq.s32.totalorder %s30, 1
      %p174 = por %p172, %p173
      %p175 = scmp.ne.s32.totalorder %s166, %s167
      %p176 = scmp.eq.s32.totalorder %s30, 0
      %p177 = por %p175, %p176
      %p178 = scmp.ne.s32.totalorder %s166, %s167
      %p179 = scmp.eq.s32.totalorder %s31, 1
      %p180 = por %p178, %p179
      %p182 = scmp.ne.s32.totalorder %s167, %s181
      %p183 = scmp.eq.s32.totalorder %s31, 0
      %p184 = por %p182, %p183
      %s186 = sadd.s32 %s185, 1
      %p189 = scmp.eq.s32.totalorder %s25, 1
      %p190 = scmp.ne.s32.totalorder %s185, %s187
      %p191 = scmp.eq.s32.totalorder %s25, 0
      %p192 = por %p190, %p191
      %p193 = scmp.ne.s32.totalorder %s185, %s187
      %p194 = scmp.eq.s32.totalorder %s30, 1
      %p195 = por %p193, %p194
      %p196 = scmp.ne.s32.totalorder %s187, %s188
      %p197 = scmp.eq.s32.totalorder %s30, 0
      %p198 = por %p196, %p197
      %p199 = scmp.ne.s32.totalorder %s187, %s188
      %p200 = scmp.eq.s32.totalorder %s31, 1
      %p201 = por %p199, %p200
      %p203 = scmp.ne.s32.totalorder %s188, %s202
      %p204 = scmp.eq.s32.totalorder %s31, 0
      %p205 = por %p203, %p204
      %s207 = sadd.s32 %s206, 1
      %p210 = scmp.eq.s32.totalorder %s25, 1
      %p211 = scmp.ne.s32.totalorder %s206, %s208
      %p212 = scmp.eq.s32.totalorder %s25, 0
      %p213 = por %p211, %p212
      %p214 = scmp.ne.s32.totalorder %s206, %s208
      %p215 = scmp.eq.s32.totalorder %s30, 1
      %p216 = por %p214, %p215
      %p217 = scmp.ne.s32.totalorder %s208, %s209
      %p218 = scmp.eq.s32.totalorder %s30, 0
      %p219 = por %p217, %p218
      %p220 = scmp.ne.s32.totalorder %s208, %s209
      %p221 = scmp.eq.s32.totalorder %s31, 1
      %p222 = por %p220, %p221
      %p224 = scmp.ne.s32.totalorder %s209, %s223
      %p225 = scmp.eq.s32.totalorder %s31, 0
      %p226 = por %p224, %p225
      %s228 = sadd.s32 %s227, 1
      %p231 = scmp.eq.s32.totalorder %s25, 1
      %p232 = scmp.ne.s32.totalorder %s227, %s229
      %p233 = scmp.eq.s32.totalorder %s25, 0
      %p234 = por %p232, %p233
      %p235 = scmp.ne.s32.totalorder %s227, %s229
      %p236 = scmp.eq.s32.totalorder %s30, 1
      %p237 = por %p235, %p236
      %p238 = scmp.ne.s32.totalorder %s229, %s230
      %p239 = scmp.eq.s32.totalorder %s30, 0
      %p240 = por %p238, %p239
      %p241 = scmp.ne.s32.totalorder %s229, %s230
      %p242 = scmp.eq.s32.totalorder %s31, 1
      %p243 = por %p241, %p242
      %p245 = scmp.ne.s32.totalorder %s230, %s244
      %p246 = scmp.eq.s32.totalorder %s31, 0
      %p247 = por %p245, %p246
      %s249 = sadd.s32 %s248, 1
      %p252 = scmp.eq.s32.totalorder %s25, 1
      %p253 = scmp.ne.s32.totalorder %s248, %s250
      %p254 = scmp.eq.s32.totalorder %s25, 0
      %p255 = por %p253, %p254
      %p256 = scmp.ne.s32.totalorder %s248, %s250
      %p257 = scmp.eq.s32.totalorder %s30, 1
      %p258 = por %p256, %p257
      %p259 = scmp.ne.s32.totalorder %s250, %s251
      %p260 = scmp.eq.s32.totalorder %s30, 0
      %p261 = por %p259, %p260
      %p262 = scmp.ne.s32.totalorder %s250, %s251
      %p263 = scmp.eq.s32.totalorder %s31, 1
      %p264 = por %p262, %p263
      %p266 = scmp.ne.s32.totalorder %s251, %s265
      %p267 = scmp.eq.s32.totalorder %s31, 0
      %p268 = por %p266, %p267
      %s269 = ssub.s32 %s25, %s32
      %p270 = scmp.eq.s32.totalorder %s269, 0
      %s272 = sadd.s32 %s271, 1
      %s273 = scalar_select %p270, %s271, %s272
      %p276 = pneg %p270
      %p277 = scmp.eq.s32.totalorder %s25, 1
      %p278 = por %p276, %p277
      %p279 = scmp.ne.s32.totalorder %s271, %s274
      %p280 = scmp.eq.s32.totalorder %s25, 0
      %p281 = por %p279, %p280
      %p282 = scmp.ne.s32.totalorder %s271, %s274
      %p283 = scmp.eq.s32.totalorder %s30, 1
      %p284 = por %p282, %p283
      %p285 = scmp.ne.s32.totalorder %s274, %s275
      %p286 = scmp.eq.s32.totalorder %s30, 0
      %p287 = por %p285, %p286
      %p288 = scmp.ne.s32.totalorder %s274, %s275
      %p289 = scmp.eq.s32.totalorder %s31, 1
      %p290 = por %p288, %p289
      %p292 = scmp.ne.s32.totalorder %s275, %s291
      %p293 = scmp.eq.s32.totalorder %s31, 0
      %p294 = por %p292, %p293
      %p295 = scmp.le.s32.totalorder 1, %s25
      %p296 = scmp.lt.s32.totalorder %s25, 3
      %p297 = pnand %p295, %p296
      %p298 = pneg %p297
      // Predicated region
      $region9: #{tpu_custom_call.1} parent=5 // pred_check
        _
      $region10: #{tpu_custom_call.1} parent=5 // pred_check_branch
        %300 = sbr.rel (%p297) target = $region12
      $region11: #{tpu_custom_call.1} parent=5 // pred_region
        %s301 = ssub.s32 %s25, 1
        // Predicated region
        $region13: #{tpu_custom_call.1} parent=11 // pred_check
          %p302 = pneg %p72
        $region14: #{tpu_custom_call.1} parent=11 // pred_check_branch
          %304 = sbr.rel (%p302) target = $region16
        $region15: #{tpu_custom_call.1} parent=11 // pred_region
          %s306 = ssub.s32 512, 512
          %307 = vsyncadd [#allocation6], %s306
          %s308 = sshll.u32 [#allocation5], 4
          %s309 = int_to_ptr.vmem [resolvable:$true] %s308
          %314 = dma.hbm_to_vmem [thread:$0]  %s1, 512, %s309, [#allocation6], 128, 128, 8
        $region16: #{tpu_custom_call.1} parent=11 // pred_fallthru
          _
        // Predicated region
        $region17: #{tpu_custom_call.1} parent=11 // pred_check
          %p315 = pneg %p93
        $region18: #{tpu_custom_call.1} parent=11 // pred_check_branch
          %317 = sbr.rel (%p315) target = $region20
        $region19: #{tpu_custom_call.1} parent=11 // pred_region
          _
        $region20: #{tpu_custom_call.1} parent=11 // pred_fallthru
          _
        // Predicated region
        $region21: #{tpu_custom_call.1} parent=11 // pred_check
          %p318 = pneg %p114
        $region22: #{tpu_custom_call.1} parent=11 // pred_check_branch
          %320 = sbr.rel (%p318) target = $region24
        $region23: #{tpu_custom_call.1} parent=11 // pred_region
          _
        $region24: #{tpu_custom_call.1} parent=11 // pred_fallthru
          _
        // Predicated region
        $region25: #{tpu_custom_call.1} parent=11 // pred_check
          %p321 = pneg %p135
        $region26: #{tpu_custom_call.1} parent=11 // pred_check_branch
          %323 = sbr.rel (%p321) target = $region28
        $region27: #{tpu_custom_call.1} parent=11 // pred_region
          _
        $region28: #{tpu_custom_call.1} parent=11 // pred_fallthru
          _
        // Predicated region
        $region29: #{tpu_custom_call.1} parent=11 // pred_check
          %p324 = pneg %p156
        $region30: #{tpu_custom_call.1} parent=11 // pred_check_branch
          %326 = sbr.rel (%p324) target = $region32
        $region31: #{tpu_custom_call.1} parent=11 // pred_region
          %s328 = ssub.s32 2048, 2048
          %329 = vsyncadd [#allocation6], %s328
          %s330 = sshll.u32 [#allocation7], 4
          %s331 = int_to_ptr.vmem [resolvable:$true] %s330
          %336 = dma.hbm_to_vmem [thread:$0]  %s5, 2048, %s331, [#allocation6], 128, 128, 8
        $region32: #{tpu_custom_call.1} parent=11 // pred_fallthru
          _
        // Predicated region
        $region33: #{tpu_custom_call.1} parent=11 // pred_check
          %p337 = pneg %p177
        $region34: #{tpu_custom_call.1} parent=11 // pred_check_branch
          %339 = sbr.rel (%p337) target = $region36
        $region35: #{tpu_custom_call.1} parent=11 // pred_region
          _
        $region36: #{tpu_custom_call.1} parent=11 // pred_fallthru
          _
        // Predicated region
        $region37: #{tpu_custom_call.1} parent=11 // pred_check
          %p340 = pneg %p198
        $region38: #{tpu_custom_call.1} parent=11 // pred_check_branch
          %342 = sbr.rel (%p340) target = $region40
        $region39: #{tpu_custom_call.1} parent=11 // pred_region
          %s344 = ssub.s32 2048, 2048
          %345 = vsyncadd [#allocation9], %s344
          %s346 = sshll.u32 [#allocation8], 4
          %s347 = int_to_ptr.vmem [resolvable:$true] %s346
          %352 = dma.hbm_to_vmem [thread:$0]  %s7, 2048, %s347, [#allocation9], 128, 128, 8
        $region40: #{tpu_custom_call.1} parent=11 // pred_fallthru
          _
        // Predicated region
        $region41: #{tpu_custom_call.1} parent=11 // pred_check
          %p353 = pneg %p219
        $region42: #{tpu_custom_call.1} parent=11 // pred_check_branch
          %355 = sbr.rel (%p353) target = $region44
        $region43: #{tpu_custom_call.1} parent=11 // pred_region
          _
        $region44: #{tpu_custom_call.1} parent=11 // pred_fallthru
          _
        // Predicated region
        $region45: #{tpu_custom_call.1} parent=11 // pred_check
          %p356 = pneg %p240
        $region46: #{tpu_custom_call.1} parent=11 // pred_check_branch
          %358 = sbr.rel (%p356) target = $region48
        $region47: #{tpu_custom_call.1} parent=11 // pred_region
          %s360 = ssub.s32 2048, 2048
          %361 = vsyncadd [#allocation9], %s360
          %s362 = sshll.u32 [#allocation10], 4
          %s363 = int_to_ptr.vmem [resolvable:$true] %s362
          %368 = dma.hbm_to_vmem [thread:$0]  %s9, 2048, %s363, [#allocation9], 128, 128, 8
        $region48: #{tpu_custom_call.1} parent=11 // pred_fallthru
          _
        // Predicated region
        $region49: #{tpu_custom_call.1} parent=11 // pred_check
          %p369 = pneg %p261
        $region50: #{tpu_custom_call.1} parent=11 // pred_check_branch
          %371 = sbr.rel (%p369) target = $region52
        $region51: #{tpu_custom_call.1} parent=11 // pred_region
          _
        $region52: #{tpu_custom_call.1} parent=11 // pred_fallthru
          _
      $region12: #{tpu_custom_call.1} parent=5 // pred_fallthru
        _
      %p372 = scmp.lt.s32.totalorder %s25, 2
      // Predicated region
      $region53: #{tpu_custom_call.1} parent=5 // pred_check
        %p373 = pneg %p372
      $region54: #{tpu_custom_call.1} parent=5 // pred_check_branch
        %375 = sbr.rel (%p373) target = $region56
      $region55: #{tpu_custom_call.1} parent=5 // pred_region
        // Predicated region
        $region57: #{tpu_custom_call.1} parent=55 // pred_check
          %p376 = pneg %p45
        $region58: #{tpu_custom_call.1} parent=55 // pred_check_branch
          %378 = sbr.rel (%p376) target = $region60
        $region59: #{tpu_custom_call.1} parent=55 // pred_region
          %s379 = sand.u32 %s35, 1
          %s380 = scalar_lea.sflag [#allocation3], %s379
          %s381 = sand.u32 %s35, 1
          %s382 = smul.addr %s381, 8
          %s383 = scalar_lea.vmem [#allocation2], %s382
          %s385 = ssub.s32 128, 128
          %386 = vsyncadd %s380, %s385
          %s387 = smul.addr %s25, 128
          %s388 = scalar_lea.hbm %s0, %s387
          %s390 = sshll.u32 %s383, 4
          %s391 = int_to_ptr.vmem [resolvable:$true] %s390
          %393 = dma.hbm_to_vmem [thread:$0]  %s388, 128, %s391, %s380
        $region60: #{tpu_custom_call.1} parent=55 // pred_fallthru
          _
      $region56: #{tpu_custom_call.1} parent=5 // pred_fallthru
        _
      %p394 = scmp.le.s32.totalorder 1, %s25
      %p395 = scmp.lt.s32.totalorder %s25, 3
      %p396 = pnand %p394, %p395
      %p397 = pneg %p396
      // Predicated region
      $region61: #{tpu_custom_call.1} parent=5 // pred_check
        _
      $region62: #{tpu_custom_call.1} parent=5 // pred_check_branch
        %399 = sbr.rel (%p396) target = $region64
      $region63: #{tpu_custom_call.1} parent=5 // pred_region
        %s400 = ssub.s32 %s25, 1
        %s401 = sand.u32 %s38, 1
        %s402 = scalar_lea.sflag [#allocation3], %s401
        %s403 = sand.u32 %s38, 1
        %s404 = smul.addr %s403, 8
        %s405 = scalar_lea.vmem [#allocation2], %s404
        // Predicated region
        $region65: #{tpu_custom_call.1} parent=63 // pred_check
          %p406 = pneg %p51
        $region66: #{tpu_custom_call.1} parent=63 // pred_check_branch
          %408 = sbr.rel (%p406) target = $region68
        $region67: #{tpu_custom_call.1} parent=63 // pred_region
          %409 = dma.done %s402, 128
        $region68: #{tpu_custom_call.1} parent=63 // pred_fallthru
          _
        // Predicated region
        $region69: #{tpu_custom_call.1} parent=63 // pred_check
          %p410 = pneg %p72
        $region70: #{tpu_custom_call.1} parent=63 // pred_check_branch
          %412 = sbr.rel (%p410) target = $region72
        $region71: #{tpu_custom_call.1} parent=63 // pred_region
          %413 = dma.done [#allocation6], 512
        $region72: #{tpu_custom_call.1} parent=63 // pred_fallthru
          _
        // Predicated region
        $region73: #{tpu_custom_call.1} parent=63 // pred_check
          %p414 = pneg %p156
        $region74: #{tpu_custom_call.1} parent=63 // pred_check_branch
          %416 = sbr.rel (%p414) target = $region76
        $region75: #{tpu_custom_call.1} parent=63 // pred_region
          %417 = dma.done [#allocation6], 2048
        $region76: #{tpu_custom_call.1} parent=63 // pred_fallthru
          _
        // Predicated region
        $region77: #{tpu_custom_call.1} parent=63 // pred_check
          %p418 = pneg %p198
        $region78: #{tpu_custom_call.1} parent=63 // pred_check_branch
          %420 = sbr.rel (%p418) target = $region80
        $region79: #{tpu_custom_call.1} parent=63 // pred_region
          %421 = dma.done [#allocation9], 2048
        $region80: #{tpu_custom_call.1} parent=63 // pred_fallthru
          _
        // Predicated region
        $region81: #{tpu_custom_call.1} parent=63 // pred_check
          %p422 = pneg %p240
        $region82: #{tpu_custom_call.1} parent=63 // pred_check_branch
          %424 = sbr.rel (%p422) target = $region84
        $region83: #{tpu_custom_call.1} parent=63 // pred_region
          %425 = dma.done [#allocation9], 2048
        $region84: #{tpu_custom_call.1} parent=63 // pred_fallthru
          _
        %s426 = sand.u32 %s38, 1
        %s427 = scalar_lea.sflag [#allocation3], %s426
        %s428 = sand.u32 %s38, 1
        %s429 = smul.addr %s428, 8
        %s430 = scalar_lea.vmem [#allocation2], %s429
        %p431 = pneg %p51
        %p432 = pneg %p48
        %p433 = pneg %p72
        %p434 = pneg %p69
        %p435 = pneg %p93
        %p436 = pneg %p90
        %p437 = pneg %p114
        %p438 = pneg %p111
        %p439 = pneg %p135
        %p440 = pneg %p132
        %p441 = pneg %p156
        %p442 = pneg %p153
        %p443 = pneg %p177
        %p444 = pneg %p174
        %p445 = pneg %p198
        %p446 = pneg %p195
        %p447 = pneg %p219
        %p448 = pneg %p216
        %p449 = pneg %p240
        %p450 = pneg %p237
        %p451 = pneg %p261
        %p452 = pneg %p258
        %p453 = pneg %p287
        %p454 = pneg %p284
        %s455 = sand.u32 %s274, 1
        %s456 = scalar_lea.sflag [#allocation4], %s455
        %s457 = sand.u32 %s274, 1
        %s458 = smul.addr %s457, 8
        %s459 = scalar_lea.vmem [#allocation11], %s458
        %v460 = vld [vmem:[%s405] sm:$0xff]
        %v461 = vld [vmem:[#allocation5] sm:$0xff]
        %v462 = vld [vmem:[#allocation5 + $0x8] sm:$0xff]
        %v463 = vld [vmem:[#allocation5 + $0x10] sm:$0xff]
        %v464 = vld [vmem:[#allocation5 + $0x18] sm:$0xff]
        %v465 = vld [vmem:[%s2] sm:$0x1]
        %v467 = vlaneseq
        %v468 = vshrl.u32 %v467, 7
        %v469 = vsub.s32 0, %v468
        %v470 = vrot.slane %v465, %v469
        %vm472 = vcmask 261120
        %v474 = vsel %vm472, %v460, 0
        %476 = vmatprep.subr.mxu0 0.0
        %477 = vmatpush1.msra.mxu0 %v461
        %478 = vmatprep.subr.mxu0 0.0
        %479 = vmatpush1.msra.mxu0 %v462
        %480 = vmatprep.subr.mxu0 0.0
        %481 = vmatpush1.msra.mxu0 %v463
        %482 = vmatprep.subr.mxu0 0.0
        %483 = vmatpush1.msra.mxu0 %v464
        %484 = vmatprep.subr.mxu0 0.0
        %485 = vmatpush1.msra.mxu0 0.0
        %486 = vmatprep.subr.mxu0 0.0
        %487 = vmatpush1.msra.mxu0 0.0
        %488 = vmatprep.subr.mxu0 0.0
        %489 = vmatpush1.msra.mxu0 0.0
        %490 = vmatprep.subr.mxu0 0.0
        %491 = vmatpush1.msra.mxu0 0.0
        %492 = vmatprep.subr.mxu0 0.0
        %493 = vmatpush1.msra.mxu0 0.0
        %494 = vmatprep.subr.mxu0 0.0
        %495 = vmatpush1.msra.mxu0 0.0
        %496 = vmatprep.subr.mxu0 0.0
        %497 = vmatpush1.msra.mxu0 0.0
        %498 = vmatprep.subr.mxu0 0.0
        %499 = vmatpush1.msra.mxu0 0.0
        %500 = vmatprep.subr.mxu0 0.0
        %501 = vmatpush1.msra.mxu0 0.0
        %502 = vmatprep.subr.mxu0 0.0
        %503 = vmatpush1.msra.mxu0 0.0
        %504 = vmatprep.subr.mxu0 0.0
        %505 = vmatpush1.msra.mxu0 0.0
        %506 = vmatprep.subr.mxu0 0.0
        %507 = vmatpush1.msra.mxu0 0.0
        %508 = vmatprep.subr.mxu0 0.0
        %509 = vmatpush1.msra.mxu0 0.0
        %510 = vmatprep.subr.mxu0 0.0
        %511 = vmatpush1.msra.mxu0 0.0
        %512 = vmatprep.subr.mxu0 0.0
        %513 = vmatpush1.msra.mxu0 0.0
        %514 = vmatprep.subr.mxu0 0.0
        %515 = vmatpush1.msra.mxu0 0.0
        %516 = vmatprep.subr.mxu0 0.0
        %517 = vmatpush1.msra.mxu0 0.0
        %518 = vmatprep.subr.mxu0 0.0
        %519 = vmatpush1.msra.mxu0 0.0
        %520 = vmatprep.subr.mxu0 0.0
        %521 = vmatpush1.msra.mxu0 0.0
        %522 = vmatprep.subr.mxu0 0.0
        %523 = vmatpush1.msra.mxu0 0.0
        %524 = vmatprep.subr.mxu0 0.0
        %525 = vmatpush1.msra.mxu0 0.0
        %526 = vmatprep.subr.mxu0 0.0
        %527 = vmatpush1.msra.mxu0 0.0
        %528 = vmatprep.subr.mxu0 0.0
        %529 = vmatpush1.msra.mxu0 0.0
        %530 = vmatprep.subr.mxu0 0.0
        %531 = vmatpush1.msra.mxu0 0.0
        %532 = vmatprep.subr.mxu0 0.0
        %533 = vmatpush1.msra.mxu0 0.0
        %534 = vmatprep.subr.mxu0 0.0
        %535 = vmatpush1.msra.mxu0 0.0
        %536 = vmatprep.subr.mxu0 0.0
        %537 = vmatpush1.msra.mxu0 0.0
        %538 = vmatprep.subr.mxu0 0.0
        %539 = vmatpush1.msra.mxu0 0.0
        %540 = vmatprep.mubr.f32.mxu0 0.0
        %541 = vmatmul.mubr.f32.gmra.mrb[0].mxu0 %v474
        %v542 = vpop.f32.mrb[0].mxu0
        %v543 = vadd.f32 %v470, %v542
        %v544 = vpop.f32.mrb[0].mxu0
        %545 = vdwg.mxu0
        %546 = vadd.xlane.f32.xlu0 %v543
        %v547 = vpop.xlane.xlu0 %546
        %v548 = vmul.f32 %v543, %v543
        %549 = vadd.xlane.f32.xlu0 %v548
        %v550 = vpop.xlane.xlu0 %549
        %v551 = vmul.f32 %v547, 0.03125
        %v552 = vmul.f32 %v550, 0.03125
        %v553 = vmul.f32 %v551, %v551
        %v554 = vsub.f32 %v552, %v553
        %v555 = vmax.f32 %v554, 0.0
        %v556 = vsub.f32 %v543, %v551
        %v557 = vadd.f32 %v555, 1e-05
        %v558 = vrsqrt.pop %v557
        %v559 = vmul.f32 %v556, %v558
        %v560 = vld [vmem:[%s3] sm:$0x1]
        %v562 = vlaneseq
        %v563 = vshrl.u32 %v562, 7
        %v564 = vsub.s32 0, %v563
        %v565 = vrot.slane %v560, %v564
        %v567 = vmul.f32 %v559, %v565
        %v568 = vld [vmem:[%s4] sm:$0x1]
        %v570 = vlaneseq
        %v571 = vshrl.u32 %v570, 7
        %v572 = vsub.s32 0, %v571
        %v573 = vrot.slane %v568, %v572
        %v575 = vadd.f32 %v567, %v573
        %v576 = vtanh.pop %v575
        %v577 = vld [vmem:[#allocation7] sm:$0xff]
        %v578 = vld [vmem:[#allocation7 + $0x8] sm:$0xff]
        %v579 = vld [vmem:[#allocation7 + $0x10] sm:$0xff]
        %v580 = vld [vmem:[#allocation7 + $0x18] sm:$0xff]
        %v581 = vld [vmem:[#allocation7 + $0x20] sm:$0xff]
        %v582 = vld [vmem:[#allocation7 + $0x28] sm:$0xff]
        %v583 = vld [vmem:[#allocation7 + $0x30] sm:$0xff]
        %v584 = vld [vmem:[#allocation7 + $0x38] sm:$0xff]
        %v585 = vld [vmem:[#allocation7 + $0x40] sm:$0xff]
        %v586 = vld [vmem:[#allocation7 + $0x48] sm:$0xff]
        %v587 = vld [vmem:[#allocation7 + $0x50] sm:$0xff]
        %v588 = vld [vmem:[#allocation7 + $0x58] sm:$0xff]
        %v589 = vld [vmem:[#allocation7 + $0x60] sm:$0xff]
        %v590 = vld [vmem:[#allocation7 + $0x68] sm:$0xff]
        %v591 = vld [vmem:[#allocation7 + $0x70] sm:$0xff]
        %v592 = vld [vmem:[#allocation7 + $0x78] sm:$0xff]
        %v593 = vld [vmem:[%s6] sm:$0x1]
        %v595 = vlaneseq
        %v596 = vshrl.u32 %v595, 7
        %v597 = vsub.s32 0, %v596
        %v598 = vrot.slane %v593, %v597
        %600 = vmatprep.subr.mxu0 0.0
        %601 = vmatpush1.msra.mxu0 %v577
        %602 = vmatprep.subr.mxu0 0.0
        %603 = vmatpush1.msra.mxu0 %v578
        %604 = vmatprep.subr.mxu0 0.0
        %605 = vmatpush1.msra.mxu0 %v579
        %606 = vmatprep.subr.mxu0 0.0
        %607 = vmatpush1.msra.mxu0 %v580
        %608 = vmatprep.subr.mxu0 0.0
        %609 = vmatpush1.msra.mxu0 %v581
        %610 = vmatprep.subr.mxu0 0.0
        %611 = vmatpush1.msra.mxu0 %v582
        %612 = vmatprep.subr.mxu0 0.0
        %613 = vmatpush1.msra.mxu0 %v583
        %614 = vmatprep.subr.mxu0 0.0
        %615 = vmatpush1.msra.mxu0 %v584
        %616 = vmatprep.subr.mxu0 0.0
        %617 = vmatpush1.msra.mxu0 %v585
        %618 = vmatprep.subr.mxu0 0.0
        %619 = vmatpush1.msra.mxu0 %v586
        %620 = vmatprep.subr.mxu0 0.0
        %621 = vmatpush1.msra.mxu0 %v587
        %622 = vmatprep.subr.mxu0 0.0
        %623 = vmatpush1.msra.mxu0 %v588
        %624 = vmatprep.subr.mxu0 0.0
        %625 = vmatpush1.msra.mxu0 %v589
        %626 = vmatprep.subr.mxu0 0.0
        %627 = vmatpush1.msra.mxu0 %v590
        %628 = vmatprep.subr.mxu0 0.0
        %629 = vmatpush1.msra.mxu0 %v591
        %630 = vmatprep.subr.mxu0 0.0
        %631 = vmatpush1.msra.mxu0 %v592
        %632 = vmatprep.subr.mxu0 0.0
        %633 = vmatpush1.msra.mxu0 0.0
        %634 = vmatprep.subr.mxu0 0.0
        %635 = vmatpush1.msra.mxu0 0.0
        %636 = vmatprep.subr.mxu0 0.0
        %637 = vmatpush1.msra.mxu0 0.0
        %638 = vmatprep.subr.mxu0 0.0
        %639 = vmatpush1.msra.mxu0 0.0
        %640 = vmatprep.subr.mxu0 0.0
        %641 = vmatpush1.msra.mxu0 0.0
        %642 = vmatprep.subr.mxu0 0.0
        %643 = vmatpush1.msra.mxu0 0.0
        %644 = vmatprep.subr.mxu0 0.0
        %645 = vmatpush1.msra.mxu0 0.0
        %646 = vmatprep.subr.mxu0 0.0
        %647 = vmatpush1.msra.mxu0 0.0
        %648 = vmatprep.subr.mxu0 0.0
        %649 = vmatpush1.msra.mxu0 0.0
        %650 = vmatprep.subr.mxu0 0.0
        %651 = vmatpush1.msra.mxu0 0.0
        %652 = vmatprep.subr.mxu0 0.0
        %653 = vmatpush1.msra.mxu0 0.0
        %654 = vmatprep.subr.mxu0 0.0
        %655 = vmatpush1.msra.mxu0 0.0
        %656 = vmatprep.subr.mxu0 0.0
        %657 = vmatpush1.msra.mxu0 0.0
        %658 = vmatprep.subr.mxu0 0.0
        %659 = vmatpush1.msra.mxu0 0.0
        %660 = vmatprep.subr.mxu0 0.0
        %661 = vmatpush1.msra.mxu0 0.0
        %662 = vmatprep.subr.mxu0 0.0
        %663 = vmatpush1.msra.mxu0 0.0
        %664 = vmatprep.mubr.f32.mxu0 0.0
        %665 = vmatmul.mubr.f32.gmra.mrb[0].mxu0 %v576
        %v666 = vpop.f32.mrb[0].mxu0
        %v667 = vadd.f32 %v598, %v666
        %v668 = vpop.f32.mrb[0].mxu0
        %669 = vdwg.mxu0
        %v670 = vmax.f32 %v667, 0.0
        %v671 = vld [vmem:[#allocation8] sm:$0xff]
        %v672 = vld [vmem:[#allocation8 + $0x8] sm:$0xff]
        %v673 = vld [vmem:[#allocation8 + $0x10] sm:$0xff]
        %v674 = vld [vmem:[#allocation8 + $0x18] sm:$0xff]
        %v675 = vld [vmem:[#allocation8 + $0x20] sm:$0xff]
        %v676 = vld [vmem:[#allocation8 + $0x28] sm:$0xff]
        %v677 = vld [vmem:[#allocation8 + $0x30] sm:$0xff]
        %v678 = vld [vmem:[#allocation8 + $0x38] sm:$0xff]
        %v679 = vld [vmem:[#allocation8 + $0x40] sm:$0xff]
        %v680 = vld [vmem:[#allocation8 + $0x48] sm:$0xff]
        %v681 = vld [vmem:[#allocation8 + $0x50] sm:$0xff]
        %v682 = vld [vmem:[#allocation8 + $0x58] sm:$0xff]
        %v683 = vld [vmem:[#allocation8 + $0x60] sm:$0xff]
        %v684 = vld [vmem:[#allocation8 + $0x68] sm:$0xff]
        %v685 = vld [vmem:[#allocation8 + $0x70] sm:$0xff]
        %v686 = vld [vmem:[#allocation8 + $0x78] sm:$0xff]
        %v687 = vld [vmem:[%s8] sm:$0x1]
        %v689 = vlaneseq
        %v690 = vshrl.u32 %v689, 7
        %v691 = vsub.s32 0, %v690
        %v692 = vrot.slane %v687, %v691
        %694 = vmatprep.subr.mxu0 0.0
        %695 = vmatpush1.msra.mxu0 %v671
        %696 = vmatprep.subr.mxu0 0.0
        %697 = vmatpush1.msra.mxu0 %v672
        %698 = vmatprep.subr.mxu0 0.0
        %699 = vmatpush1.msra.mxu0 %v673
        %700 = vmatprep.subr.mxu0 0.0
        %701 = vmatpush1.msra.mxu0 %v674
        %702 = vmatprep.subr.mxu0 0.0
        %703 = vmatpush1.msra.mxu0 %v675
        %704 = vmatprep.subr.mxu0 0.0
        %705 = vmatpush1.msra.mxu0 %v676
        %706 = vmatprep.subr.mxu0 0.0
        %707 = vmatpush1.msra.mxu0 %v677
        %708 = vmatprep.subr.mxu0 0.0
        %709 = vmatpush1.msra.mxu0 %v678
        %710 = vmatprep.subr.mxu0 0.0
        %711 = vmatpush1.msra.mxu0 %v679
        %712 = vmatprep.subr.mxu0 0.0
        %713 = vmatpush1.msra.mxu0 %v680
        %714 = vmatprep.subr.mxu0 0.0
        %715 = vmatpush1.msra.mxu0 %v681
        %716 = vmatprep.subr.mxu0 0.0
        %717 = vmatpush1.msra.mxu0 %v682
        %718 = vmatprep.subr.mxu0 0.0
        %719 = vmatpush1.msra.mxu0 %v683
        %720 = vmatprep.subr.mxu0 0.0
        %721 = vmatpush1.msra.mxu0 %v684
        %722 = vmatprep.subr.mxu0 0.0
        %723 = vmatpush1.msra.mxu0 %v685
        %724 = vmatprep.subr.mxu0 0.0
        %725 = vmatpush1.msra.mxu0 %v686
        %726 = vmatprep.subr.mxu0 0.0
        %727 = vmatpush1.msra.mxu0 0.0
        %728 = vmatprep.subr.mxu0 0.0
        %729 = vmatpush1.msra.mxu0 0.0
        %730 = vmatprep.subr.mxu0 0.0
        %731 = vmatpush1.msra.mxu0 0.0
        %732 = vmatprep.subr.mxu0 0.0
        %733 = vmatpush1.msra.mxu0 0.0
        %734 = vmatprep.subr.mxu0 0.0
        %735 = vmatpush1.msra.mxu0 0.0
        %736 = vmatprep.subr.mxu0 0.0
        %737 = vmatpush1.msra.mxu0 0.0
        %738 = vmatprep.subr.mxu0 0.0
        %739 = vmatpush1.msra.mxu0 0.0
        %740 = vmatprep.subr.mxu0 0.0
        %741 = vmatpush1.msra.mxu0 0.0
        %742 = vmatprep.subr.mxu0 0.0
        %743 = vmatpush1.msra.mxu0 0.0
        %744 = vmatprep.subr.mxu0 0.0
        %745 = vmatpush1.msra.mxu0 0.0
        %746 = vmatprep.subr.mxu0 0.0
        %747 = vmatpush1.msra.mxu0 0.0
        %748 = vmatprep.subr.mxu0 0.0
        %749 = vmatpush1.msra.mxu0 0.0
        %750 = vmatprep.subr.mxu0 0.0
        %751 = vmatpush1.msra.mxu0 0.0
        %752 = vmatprep.subr.mxu0 0.0
        %753 = vmatpush1.msra.mxu0 0.0
        %754 = vmatprep.subr.mxu0 0.0
        %755 = vmatpush1.msra.mxu0 0.0
        %756 = vmatprep.subr.mxu0 0.0
        %757 = vmatpush1.msra.mxu0 0.0
        %758 = vmatprep.mubr.f32.mxu0 0.0
        %759 = vmatmul.mubr.f32.gmra.mrb[0].mxu0 %v670
        %v760 = vpop.f32.mrb[0].mxu0
        %v761 = vadd.f32 %v692, %v760
        %v762 = vpop.f32.mrb[0].mxu0
        %763 = vdwg.mxu0
        %v764 = vmax.f32 %v761, 0.0
        %v765 = vld [vmem:[#allocation10] sm:$0xff]
        %v766 = vld [vmem:[#allocation10 + $0x8] sm:$0xff]
        %v767 = vld [vmem:[#allocation10 + $0x10] sm:$0xff]
        %v768 = vld [vmem:[#allocation10 + $0x18] sm:$0xff]
        %v769 = vld [vmem:[#allocation10 + $0x20] sm:$0xff]
        %v770 = vld [vmem:[#allocation10 + $0x28] sm:$0xff]
        %v771 = vld [vmem:[#allocation10 + $0x30] sm:$0xff]
        %v772 = vld [vmem:[#allocation10 + $0x38] sm:$0xff]
        %v773 = vld [vmem:[#allocation10 + $0x40] sm:$0xff]
        %v774 = vld [vmem:[#allocation10 + $0x48] sm:$0xff]
        %v775 = vld [vmem:[#allocation10 + $0x50] sm:$0xff]
        %v776 = vld [vmem:[#allocation10 + $0x58] sm:$0xff]
        %v777 = vld [vmem:[#allocation10 + $0x60] sm:$0xff]
        %v778 = vld [vmem:[#allocation10 + $0x68] sm:$0xff]
        %v779 = vld [vmem:[#allocation10 + $0x70] sm:$0xff]
        %v780 = vld [vmem:[#allocation10 + $0x78] sm:$0xff]
        %v781 = vld [vmem:[%s10] sm:$0x1]
        %v783 = vlaneseq
        %v784 = vshrl.u32 %v783, 7
        %v785 = vsub.s32 0, %v784
        %v786 = vrot.slane %v781, %v785
        %788 = vmatprep.subr.mxu0 0.0
        %789 = vmatpush1.msra.mxu0 %v765
        %790 = vmatprep.subr.mxu0 0.0
        %791 = vmatpush1.msra.mxu0 %v766
        %792 = vmatprep.subr.mxu0 0.0
        %793 = vmatpush1.msra.mxu0 %v767
        %794 = vmatprep.subr.mxu0 0.0
        %795 = vmatpush1.msra.mxu0 %v768
        %796 = vmatprep.subr.mxu0 0.0
        %797 = vmatpush1.msra.mxu0 %v769
        %798 = vmatprep.subr.mxu0 0.0
        %799 = vmatpush1.msra.mxu0 %v770
        %800 = vmatprep.subr.mxu0 0.0
        %801 = vmatpush1.msra.mxu0 %v771
        %802 = vmatprep.subr.mxu0 0.0
        %803 = vmatpush1.msra.mxu0 %v772
        %804 = vmatprep.subr.mxu0 0.0
        %805 = vmatpush1.msra.mxu0 %v773
        %806 = vmatprep.subr.mxu0 0.0
        %807 = vmatpush1.msra.mxu0 %v774
        %808 = vmatprep.subr.mxu0 0.0
        %809 = vmatpush1.msra.mxu0 %v775
        %810 = vmatprep.subr.mxu0 0.0
        %811 = vmatpush1.msra.mxu0 %v776
        %812 = vmatprep.subr.mxu0 0.0
        %813 = vmatpush1.msra.mxu0 %v777
        %814 = vmatprep.subr.mxu0 0.0
        %815 = vmatpush1.msra.mxu0 %v778
        %816 = vmatprep.subr.mxu0 0.0
        %817 = vmatpush1.msra.mxu0 %v779
        %818 = vmatprep.subr.mxu0 0.0
        %819 = vmatpush1.msra.mxu0 %v780
        %820 = vmatprep.subr.mxu0 0.0
        %821 = vmatpush1.msra.mxu0 0.0
        %822 = vmatprep.subr.mxu0 0.0
        %823 = vmatpush1.msra.mxu0 0.0
        %824 = vmatprep.subr.mxu0 0.0
        %825 = vmatpush1.msra.mxu0 0.0
        %826 = vmatprep.subr.mxu0 0.0
        %827 = vmatpush1.msra.mxu0 0.0
        %828 = vmatprep.subr.mxu0 0.0
        %829 = vmatpush1.msra.mxu0 0.0
        %830 = vmatprep.subr.mxu0 0.0
        %831 = vmatpush1.msra.mxu0 0.0
        %832 = vmatprep.subr.mxu0 0.0
        %833 = vmatpush1.msra.mxu0 0.0
        %834 = vmatprep.subr.mxu0 0.0
        %835 = vmatpush1.msra.mxu0 0.0
        %836 = vmatprep.subr.mxu0 0.0
        %837 = vmatpush1.msra.mxu0 0.0
        %838 = vmatprep.subr.mxu0 0.0
        %839 = vmatpush1.msra.mxu0 0.0
        %840 = vmatprep.subr.mxu0 0.0
        %841 = vmatpush1.msra.mxu0 0.0
        %842 = vmatprep.subr.mxu0 0.0
        %843 = vmatpush1.msra.mxu0 0.0
        %844 = vmatprep.subr.mxu0 0.0
        %845 = vmatpush1.msra.mxu0 0.0
        %846 = vmatprep.subr.mxu0 0.0
        %847 = vmatpush1.msra.mxu0 0.0
        %848 = vmatprep.subr.mxu0 0.0
        %849 = vmatpush1.msra.mxu0 0.0
        %850 = vmatprep.subr.mxu0 0.0
        %851 = vmatpush1.msra.mxu0 0.0
        %852 = vmatprep.mubr.f32.mxu0 0.0
        %853 = vmatmul.mubr.f32.gmra.mrb[0].mxu0 %v764
        %v854 = vpop.f32.mrb[0].mxu0
        %v855 = vadd.f32 %v786, %v854
        %v856 = vpop.f32.mrb[0].mxu0
        %857 = vdwg.mxu0
        %v858 = vtanh.pop %v855
        %859 = vst [vmem:[%s459] sm:$0xff] %v858
        %s860 = sand.u32 %s274, 1
        %s861 = scalar_lea.sflag [#allocation4], %s860
        %s862 = sand.u32 %s274, 1
        %s863 = smul.addr %s862, 8
        %s864 = scalar_lea.vmem [#allocation11], %s863
        // Predicated region
        $region85: #{tpu_custom_call.1} parent=63 // pred_check
          %p865 = pneg %p284
        $region86: #{tpu_custom_call.1} parent=63 // pred_check_branch
          %867 = sbr.rel (%p865) target = $region88
        $region87: #{tpu_custom_call.1} parent=63 // pred_region
          %s869 = ssub.s32 128, 128
          %870 = vsyncadd %s861, %s869
          %s871 = smul.addr %s30, 128
          %s872 = scalar_lea.hbm %s11, %s871
          %s874 = sshll.u32 %s864, 4
          %s875 = int_to_ptr.vmem [resolvable:$true] %s874
          %877 = dma.vmem_to_hbm [thread:$0]  %s875, 128, %s872, %s861
        $region88: #{tpu_custom_call.1} parent=63 // pred_fallthru
          _
      $region64: #{tpu_custom_call.1} parent=5 // pred_fallthru
        _
      %p878 = scmp.le.s32.totalorder 2, %s25
      // Predicated region
      $region89: #{tpu_custom_call.1} parent=5 // pred_check
        %p879 = pneg %p878
      $region90: #{tpu_custom_call.1} parent=5 // pred_check_branch
        %881 = sbr.rel (%p879) target = $region92
      $region91: #{tpu_custom_call.1} parent=5 // pred_region
        %s882 = ssub.s32 %s25, 2
        // Predicated region
        $region93: #{tpu_custom_call.1} parent=91 // pred_check
          %p883 = pneg %p290
        $region94: #{tpu_custom_call.1} parent=91 // pred_check_branch
          %885 = sbr.rel (%p883) target = $region96
        $region95: #{tpu_custom_call.1} parent=91 // pred_region
          %s886 = sand.u32 %s275, 1
          %s887 = scalar_lea.sflag [#allocation4], %s886
          %s888 = sand.u32 %s275, 1
          %s889 = smul.addr %s888, 8
          %s890 = scalar_lea.vmem [#allocation11], %s889
          %891 = dma.done %s887, 128
        $region96: #{tpu_custom_call.1} parent=91 // pred_fallthru
          _
      $region92: #{tpu_custom_call.1} parent=5 // pred_fallthru
        _
    $region6: #{tpu_custom_call.1} parent=1 // loop_footer
      %s29 = sadd.s32 1, %s25
    $region7: #{tpu_custom_call.1} parent=1 // loop_footer_branch
      %24 = sbr.rel target = $region3
    $region8: #{tpu_custom_call.1} parent=1 // loop_exit
      _
    %892 = vsyncpa [#allocation3], 1
    %s893 = scalar_lea.sflag [#allocation3], 1
    %894 = vsyncpa %s893, 1
    %895 = vsyncpa [#allocation6], 1
    %896 = vsyncpa [#allocation9], 1
    %897 = vsyncpa [#allocation4], 1
    %s898 = scalar_lea.sflag [#allocation4], 1
    %899 = vsyncpa %s898, 1

// kernel: tpu_custom_call.1
$region0: #{tpu_custom_call.1}
  #allocation0 [shape = 'u32[]', space=smem, size = 0x4, offset = 0x4, fixed_abs, tag = 'smem constant byte address 0x4 - core index']
  #allocation1 [shape = 'u32[144,128]{1,0:T(1,128)}', space=vmem, size = 0x12000, scoped, tag = 'internal scratch']
  %s0 = inlined_call_operand.hbm [shape: f32[16,32], index: 0, kind: input, shape index: {}]
  %s1 = inlined_call_operand.hbm [shape: f32[32,128], index: 1, kind: input, shape index: {}]
  %s2 = inlined_call_operand.vmem [shape: f32[1,128], index: 2, kind: input, shape index: {}]
  %s3 = inlined_call_operand.vmem [shape: f32[1,128], index: 3, kind: input, shape index: {}]
  %s4 = inlined_call_operand.vmem [shape: f32[1,128], index: 4, kind: input, shape index: {}]
  %s5 = inlined_call_operand.hbm [shape: f32[128,128], index: 5, kind: input, shape index: {}]
  %s6 = inlined_call_operand.vmem [shape: f32[1,128], index: 6, kind: input, shape index: {}]
  %s7 = inlined_call_operand.hbm [shape: f32[128,128], index: 7, kind: input, shape index: {}]
  %s8 = inlined_call_operand.vmem [shape: f32[1,128], index: 8, kind: input, shape index: {}]
  %s9 = inlined_call_operand.hbm [shape: f32[128,128], index: 9, kind: input, shape index: {}]
  %s10 = inlined_call_operand.vmem [shape: f32[1,128], index: 10, kind: input, shape index: {}]
  %s11 = inlined_call_operand.hbm [shape: f32[16,128], index: 11, kind: output, shape index: {}]
  %s12 = sld [smem:[#allocation0]]
  $region97: #{tpu_custom_call.1} parent=0
    _
  %s14 = ssub.s32 1, %s12
  %s15 = scalar_select 0, %s14, %s12
  $region1: #{tpu_custom_call.1} parent=0
    #allocation2 [shape = 'u8[8192]{0}', space=vmem, size = 0x2000, scoped, tag = 'input window, operand 0']
    #allocation3 [shape = 's32[2]{0}', space=sflag, size = 0x8, scoped, tag = 'scoped memory for tpu_custom_call.1']
    #allocation4 [shape = 's32[2]{0}', space=sflag, size = 0x8, scoped, tag = 'scoped memory for tpu_custom_call.1']
    #allocation5 [shape = 'u8[16384]{0}', space=vmem, size = 0x4000, scoped, tag = 'input window, operand 1, single buffered']
    #allocation6 [shape = 's32[1]{0}', space=sflag, size = 0x4, scoped, tag = 'scoped memory for tpu_custom_call.1']
    #allocation7 [shape = 'u8[65536]{0}', space=vmem, size = 0x10000, scoped, tag = 'input window, operand 5, single buffered']
    #allocation8 [shape = 'u8[65536]{0}', space=vmem, size = 0x10000, scoped, tag = 'input window, operand 7, single buffered']
    #allocation9 [shape = 's32[1]{0}', space=sflag, size = 0x4, scoped, tag = 'scoped memory for tpu_custom_call.1']
    #allocation10 [shape = 'u8[65536]{0}', space=vmem, size = 0x10000, scoped, tag = 'input window, operand 9, single buffered']
    #allocation11 [shape = 'u8[8192]{0}', space=vmem, size = 0x2000, scoped, tag = 'output window, operand 0']
    %16 = vsyncpa [#allocation3], 0
    %s17 = scalar_lea.sflag [#allocation3], 1
    %18 = vsyncpa %s17, 0
    %19 = vsyncpa [#allocation6], 0
    %20 = vsyncpa [#allocation9], 0
    %21 = vsyncpa [#allocation4], 0
    %s22 = scalar_lea.sflag [#allocation4], 1
    %23 = vsyncpa %s22, 0
    loop: start=0, step=1, limit=4
    $region2: #{tpu_custom_call.1} parent=1 // loop_pre_header
      _
    $region3: #{tpu_custom_call.1} parent=1 // loop_header
      %s25 = sphi 0, %s29
      %p26 = scmp.ge.s32.totalorder %s25, 4
      %s35 = sphi 0, %s37
      %s38 = sphi 0, %s35
      %s39 = sphi 0, %s38
      %s55 = sphi 0, %s39
      %s59 = sphi 0, %s59
      %s61 = sphi 0, %s59
      %s62 = sphi 0, %s61
      %s76 = sphi 0, %s62
      %s80 = sphi 0, %s80
      %s82 = sphi 0, %s80
      %s83 = sphi 0, %s82
      %s97 = sphi 0, %s83
      %s101 = sphi 0, %s101
      %s103 = sphi 0, %s101
      %s104 = sphi 0, %s103
      %s118 = sphi 0, %s104
      %s122 = sphi 0, %s122
      %s124 = sphi 0, %s122
      %s125 = sphi 0, %s124
      %s139 = sphi 0, %s125
      %s143 = sphi 0, %s143
      %s145 = sphi 0, %s143
      %s146 = sphi 0, %s145
      %s160 = sphi 0, %s146
      %s164 = sphi 0, %s164
      %s166 = sphi 0, %s164
      %s167 = sphi 0, %s166
      %s181 = sphi 0, %s167
      %s185 = sphi 0, %s185
      %s187 = sphi 0, %s185
      %s188 = sphi 0, %s187
      %s202 = sphi 0, %s188
      %s206 = sphi 0, %s206
      %s208 = sphi 0, %s206
      %s209 = sphi 0, %s208
      %s223 = sphi 0, %s209
      %s227 = sphi 0, %s227
      %s229 = sphi 0, %s227
      %s230 = sphi 0, %s229
      %s244 = sphi 0, %s230
      %s248 = sphi 0, %s248
      %s250 = sphi 0, %s248
      %s251 = sphi 0, %s250
      %s265 = sphi 0, %s251
      %s271 = sphi 0, %s273
      %s274 = sphi 0, %s271
      %s275 = sphi 0, %s274
      %s291 = sphi 0, %s275
    $region4: #{tpu_custom_call.1} parent=1 // loop_header_branch
      %28 = sbr.rel (%p26) target = $region8
    $region5: #{tpu_custom_call.1} parent=1 // loop_body
      %s30 = ssub.s32 %s25, 1
      %s31 = ssub.s32 %s25, 2
      %s32 = sadd.s32 %s25, 1
      %s33 = ssub.s32 %s25, %s32
      %p34 = scmp.eq.s32.totalorder %s33, 0
      %s36 = sadd.s32 %s35, 1
      %s37 = scalar_select %p34, %s35, %s36
      %p40 = pneg %p34
      %p41 = scmp.eq.s32.totalorder %s25, 1
      %p42 = por %p40, %p41
      %p43 = scmp.ne.s32.totalorder %s35, %s38
      %p44 = scmp.eq.s32.totalorder %s25, 0
      %p45 = por %p43, %p44
      %p46 = scmp.ne.s32.totalorder %s35, %s38
      %p47 = scmp.eq.s32.totalorder %s30, 1
      %p48 = por %p46, %p47
      %p49 = scmp.ne.s32.totalorder %s38, %s39
      %p50 = scmp.eq.s32.totalorder %s30, 0
      %p51 = por %p49, %p50
      %p52 = scmp.ne.s32.totalorder %s38, %s39
      %p53 = scmp.eq.s32.totalorder %s31, 1
      %p54 = por %p52, %p53
      %p56 = scmp.ne.s32.totalorder %s39, %s55
      %p57 = scmp.eq.s32.totalorder %s31, 0
      %p58 = por %p56, %p57
      %s60 = sadd.s32 %s59, 1
      %p63 = scmp.eq.s32.totalorder %s25, 1
      %p64 = scmp.ne.s32.totalorder %s59, %s61
      %p65 = scmp.eq.s32.totalorder %s25, 0
      %p66 = por %p64, %p65
      %p67 = scmp.ne.s32.totalorder %s59, %s61
      %p68 = scmp.eq.s32.totalorder %s30, 1
      %p69 = por %p67, %p68
      %p70 = scmp.ne.s32.totalorder %s61, %s62
      %p71 = scmp.eq.s32.totalorder %s30, 0
      %p72 = por %p70, %p71
      %p73 = scmp.ne.s32.totalorder %s61, %s62
      %p74 = scmp.eq.s32.totalorder %s31, 1
      %p75 = por %p73, %p74
      %p77 = scmp.ne.s32.totalorder %s62, %s76
      %p78 = scmp.eq.s32.totalorder %s31, 0
      %p79 = por %p77, %p78
      %s81 = sadd.s32 %s80, 1
      %p84 = scmp.eq.s32.totalorder %s25, 1
      %p85 = scmp.ne.s32.totalorder %s80, %s82
      %p86 = scmp.eq.s32.totalorder %s25, 0
      %p87 = por %p85, %p86
      %p88 = scmp.ne.s32.totalorder %s80, %s82
      %p89 = scmp.eq.s32.totalorder %s30, 1
      %p90 = por %p88, %p89
      %p91 = scmp.ne.s32.totalorder %s82, %s83
      %p92 = scmp.eq.s32.totalorder %s30, 0
      %p93 = por %p91, %p92
      %p94 = scmp.ne.s32.totalorder %s82, %s83
      %p95 = scmp.eq.s32.totalorder %s31, 1
      %p96 = por %p94, %p95
      %p98 = scmp.ne.s32.totalorder %s83, %s97
      %p99 = scmp.eq.s32.totalorder %s31, 0
      %p100 = por %p98, %p99
      %s102 = sadd.s32 %s101, 1
      %p105 = scmp.eq.s32.totalorder %s25, 1
      %p106 = scmp.ne.s32.totalorder %s101, %s103
      %p107 = scmp.eq.s32.totalorder %s25, 0
      %p108 = por %p106, %p107
      %p109 = scmp.ne.s32.totalorder %s101, %s103
      %p110 = scmp.eq.s32.totalorder %s30, 1
      %p111 = por %p109, %p110
      %p112 = scmp.ne.s32.totalorder %s103, %s104
      %p113 = scmp.eq.s32.totalorder %s30, 0
      %p114 = por %p112, %p113
      %p115 = scmp.ne.s32.totalorder %s103, %s104
      %p116 = scmp.eq.s32.totalorder %s31, 1
      %p117 = por %p115, %p116
      %p119 = scmp.ne.s32.totalorder %s104, %s118
      %p120 = scmp.eq.s32.totalorder %s31, 0
      %p121 = por %p119, %p120
      %s123 = sadd.s32 %s122, 1
      %p126 = scmp.eq.s32.totalorder %s25, 1
      %p127 = scmp.ne.s32.totalorder %s122, %s124
      %p128 = scmp.eq.s32.totalorder %s25, 0
      %p129 = por %p127, %p128
      %p130 = scmp.ne.s32.totalorder %s122, %s124
      %p131 = scmp.eq.s32.totalorder %s30, 1
      %p132 = por %p130, %p131
      %p133 = scmp.ne.s32.totalorder %s124, %s125
      %p134 = scmp.eq.s32.totalorder %s30, 0
      %p135 = por %p133, %p134
      %p136 = scmp.ne.s32.totalorder %s124, %s125
      %p137 = scmp.eq.s32.totalorder %s31, 1
      %p138 = por %p136, %p137
      %p140 = scmp.ne.s32.totalorder %s125, %s139
      %p141 = scmp.eq.s32.totalorder %s31, 0
      %p142 = por %p140, %p141
      %s144 = sadd.s32 %s143, 1
      %p147 = scmp.eq.s32.totalorder %s25, 1
      %p148 = scmp.ne.s32.totalorder %s143, %s145
      %p149 = scmp.eq.s32.totalorder %s25, 0
      %p150 = por %p148, %p149
      %p151 = scmp.ne.s32.totalorder %s143, %s145
      %p152 = scmp.eq.s32.totalorder %s30, 1
      %p153 = por %p151, %p152
      %p154 = scmp.ne.s32.totalorder %s145, %s146
      %p155 = scmp.eq.s32.totalorder %s30, 0
      %p156 = por %p154, %p155
      %p157 = scmp.ne.s32.totalorder %s145, %s146
      %p158 = scmp.eq.s32.totalorder %s31, 1
      %p159 = por %p157, %p158
      %p161 = scmp.ne.s32.totalorder %s146, %s160
      %p162 = scmp.eq.s32.totalorder %s31, 0
      %p163 = por %p161, %p162
      %s165 = sadd.s32 %s164, 1
      %p168 = scmp.eq.s32.totalorder %s25, 1
      %p169 = scmp.ne.s32.totalorder %s164, %s166
      %p170 = scmp.eq.s32.totalorder %s25, 0
      %p171 = por %p169, %p170
      %p172 = scmp.ne.s32.totalorder %s164, %s166
      %p173 = scmp.eq.s32.totalorder %s30, 1
      %p174 = por %p172, %p173
      %p175 = scmp.ne.s32.totalorder %s166, %s167
      %p176 = scmp.eq.s32.totalorder %s30, 0
      %p177 = por %p175, %p176
      %p178 = scmp.ne.s32.totalorder %s166, %s167
      %p179 = scmp.eq.s32.totalorder %s31, 1
      %p180 = por %p178, %p179
      %p182 = scmp.ne.s32.totalorder %s167, %s181
      %p183 = scmp.eq.s32.totalorder %s31, 0
      %p184 = por %p182, %p183
      %s186 = sadd.s32 %s185, 1
      %p189 = scmp.eq.s32.totalorder %s25, 1
      %p190 = scmp.ne.s32.totalorder %s185, %s187
      %p191 = scmp.eq.s32.totalorder %s25, 0
      %p192 = por %p190, %p191
      %p193 = scmp.ne.s32.totalorder %s185, %s187
      %p194 = scmp.eq.s32.totalorder %s30, 1
      %p195 = por %p193, %p194
      %p196 = scmp.ne.s32.totalorder %s187, %s188
      %p197 = scmp.eq.s32.totalorder %s30, 0
      %p198 = por %p196, %p197
      %p199 = scmp.ne.s32.totalorder %s187, %s188
      %p200 = scmp.eq.s32.totalorder %s31, 1
      %p201 = por %p199, %p200
      %p203 = scmp.ne.s32.totalorder %s188, %s202
      %p204 = scmp.eq.s32.totalorder %s31, 0
      %p205 = por %p203, %p204
      %s207 = sadd.s32 %s206, 1
      %p210 = scmp.eq.s32.totalorder %s25, 1
      %p211 = scmp.ne.s32.totalorder %s206, %s208
      %p212 = scmp.eq.s32.totalorder %s25, 0
      %p213 = por %p211, %p212
      %p214 = scmp.ne.s32.totalorder %s206, %s208
      %p215 = scmp.eq.s32.totalorder %s30, 1
      %p216 = por %p214, %p215
      %p217 = scmp.ne.s32.totalorder %s208, %s209
      %p218 = scmp.eq.s32.totalorder %s30, 0
      %p219 = por %p217, %p218
      %p220 = scmp.ne.s32.totalorder %s208, %s209
      %p221 = scmp.eq.s32.totalorder %s31, 1
      %p222 = por %p220, %p221
      %p224 = scmp.ne.s32.totalorder %s209, %s223
      %p225 = scmp.eq.s32.totalorder %s31, 0
      %p226 = por %p224, %p225
      %s228 = sadd.s32 %s227, 1
      %p231 = scmp.eq.s32.totalorder %s25, 1
      %p232 = scmp.ne.s32.totalorder %s227, %s229
      %p233 = scmp.eq.s32.totalorder %s25, 0
      %p234 = por %p232, %p233
      %p235 = scmp.ne.s32.totalorder %s227, %s229
      %p236 = scmp.eq.s32.totalorder %s30, 1
      %p237 = por %p235, %p236
      %p238 = scmp.ne.s32.totalorder %s229, %s230
      %p239 = scmp.eq.s32.totalorder %s30, 0
      %p240 = por %p238, %p239
      %p241 = scmp.ne.s32.totalorder %s229, %s230
      %p242 = scmp.eq.s32.totalorder %s31, 1
      %p243 = por %p241, %p242
      %p245 = scmp.ne.s32.totalorder %s230, %s244
      %p246 = scmp.eq.s32.totalorder %s31, 0
      %p247 = por %p245, %p246
      %s249 = sadd.s32 %s248, 1
      %p252 = scmp.eq.s32.totalorder %s25, 1
      %p253 = scmp.ne.s32.totalorder %s248, %s250
      %p254 = scmp.eq.s32.totalorder %s25, 0
      %p255 = por %p253, %p254
      %p256 = scmp.ne.s32.totalorder %s248, %s250
      %p257 = scmp.eq.s32.totalorder %s30, 1
      %p258 = por %p256, %p257
      %p259 = scmp.ne.s32.totalorder %s250, %s251
      %p260 = scmp.eq.s32.totalorder %s30, 0
      %p261 = por %p259, %p260
      %p262 = scmp.ne.s32.totalorder %s250, %s251
      %p263 = scmp.eq.s32.totalorder %s31, 1
      %p264 = por %p262, %p263
      %p266 = scmp.ne.s32.totalorder %s251, %s265
      %p267 = scmp.eq.s32.totalorder %s31, 0
      %p268 = por %p266, %p267
      %s269 = ssub.s32 %s25, %s32
      %p270 = scmp.eq.s32.totalorder %s269, 0
      %s272 = sadd.s32 %s271, 1
      %s273 = scalar_select %p270, %s271, %s272
      %p276 = pneg %p270
      %p277 = scmp.eq.s32.totalorder %s25, 1
      %p278 = por %p276, %p277
      %p279 = scmp.ne.s32.totalorder %s271, %s274
      %p280 = scmp.eq.s32.totalorder %s25, 0
      %p281 = por %p279, %p280
      %p282 = scmp.ne.s32.totalorder %s271, %s274
      %p283 = scmp.eq.s32.totalorder %s30, 1
      %p284 = por %p282, %p283
      %p285 = scmp.ne.s32.totalorder %s274, %s275
      %p286 = scmp.eq.s32.totalorder %s30, 0
      %p287 = por %p285, %p286
      %p288 = scmp.ne.s32.totalorder %s274, %s275
      %p289 = scmp.eq.s32.totalorder %s31, 1
      %p290 = por %p288, %p289
      %p292 = scmp.ne.s32.totalorder %s275, %s291
      %p293 = scmp.eq.s32.totalorder %s31, 0
      %p294 = por %p292, %p293
      %p295 = scmp.le.s32.totalorder 1, %s25
      %p296 = scmp.lt.s32.totalorder %s25, 3
      %p297 = pnand %p295, %p296
      %p298 = pneg %p297
      // Predicated region
      $region9: #{tpu_custom_call.1} parent=5 // pred_check
        _
      $region10: #{tpu_custom_call.1} parent=5 // pred_check_branch
        %300 = sbr.rel (%p297) target = $region12
      $region11: #{tpu_custom_call.1} parent=5 // pred_region
        %s301 = ssub.s32 %s25, 1
        // Predicated region
        $region13: #{tpu_custom_call.1} parent=11 // pred_check
          %p302 = pneg %p72
        $region14: #{tpu_custom_call.1} parent=11 // pred_check_branch
          %304 = sbr.rel (%p302) target = $region16
        $region15: #{tpu_custom_call.1} parent=11 // pred_region
          %s306 = ssub.s32 512, 512
          %307 = vsyncadd [#allocation6], %s306
          %s308 = sshll.u32 [#allocation5], 4
          %s309 = int_to_ptr.vmem [resolvable:$true] %s308
          %314 = dma.hbm_to_vmem [thread:$0]  %s1, 512, %s309, [#allocation6], 128, 128, 8
        $region16: #{tpu_custom_call.1} parent=11 // pred_fallthru
          _
        // Predicated region
        $region17: #{tpu_custom_call.1} parent=11 // pred_check
          %p315 = pneg %p93
        $region18: #{tpu_custom_call.1} parent=11 // pred_check_branch
          %317 = sbr.rel (%p315) target = $region20
        $region19: #{tpu_custom_call.1} parent=11 // pred_region
          _
        $region20: #{tpu_custom_call.1} parent=11 // pred_fallthru
          _
        // Predicated region
        $region21: #{tpu_custom_call.1} parent=11 // pred_check
          %p318 = pneg %p114
        $region22: #{tpu_custom_call.1} parent=11 // pred_check_branch
          %320 = sbr.rel (%p318) target = $region24
        $region23: #{tpu_custom_call.1} parent=11 // pred_region
          _
        $region24: #{tpu_custom_call.1} parent=11 // pred_fallthru
          _
        // Predicated region
        $region25: #{tpu_custom_call.1} parent=11 // pred_check
          %p321 = pneg %p135
        $region26: #{tpu_custom_call.1} parent=11 // pred_check_branch
          %323 = sbr.rel (%p321) target = $region28
        $region27: #{tpu_custom_call.1} parent=11 // pred_region
          _
        $region28: #{tpu_custom_call.1} parent=11 // pred_fallthru
          _
        // Predicated region
        $region29: #{tpu_custom_call.1} parent=11 // pred_check
          %p324 = pneg %p156
        $region30: #{tpu_custom_call.1} parent=11 // pred_check_branch
          %326 = sbr.rel (%p324) target = $region32
        $region31: #{tpu_custom_call.1} parent=11 // pred_region
          %s328 = ssub.s32 2048, 2048
          %329 = vsyncadd [#allocation6], %s328
          %s330 = sshll.u32 [#allocation7], 4
          %s331 = int_to_ptr.vmem [resolvable:$true] %s330
          %336 = dma.hbm_to_vmem [thread:$0]  %s5, 2048, %s331, [#allocation6], 128, 128, 8
        $region32: #{tpu_custom_call.1} parent=11 // pred_fallthru
          _
        // Predicated region
        $region33: #{tpu_custom_call.1} parent=11 // pred_check
          %p337 = pneg %p177
        $region34: #{tpu_custom_call.1} parent=11 // pred_check_branch
          %339 = sbr.rel (%p337) target = $region36
        $region35: #{tpu_custom_call.1} parent=11 // pred_region
          _
        $region36: #{tpu_custom_call.1} parent=11 // pred_fallthru
          _
        // Predicated region
        $region37: #{tpu_custom_call.1} parent=11 // pred_check
          %p340 = pneg %p198
        $region38: #{tpu_custom_call.1} parent=11 // pred_check_branch
          %342 = sbr.rel (%p340) target = $region40
        $region39: #{tpu_custom_call.1} parent=11 // pred_region
          %s344 = ssub.s32 2048, 2048
          %345 = vsyncadd [#allocation9], %s344
          %s346 = sshll.u32 [#allocation8], 4
          %s347 = int_to_ptr.vmem [resolvable:$true] %s346
          %352 = dma.hbm_to_vmem [thread:$0]  %s7, 2048, %s347, [#allocation9], 128, 128, 8
        $region40: #{tpu_custom_call.1} parent=11 // pred_fallthru
          _
        // Predicated region
        $region41: #{tpu_custom_call.1} parent=11 // pred_check
          %p353 = pneg %p219
        $region42: #{tpu_custom_call.1} parent=11 // pred_check_branch
          %355 = sbr.rel (%p353) target = $region44
        $region43: #{tpu_custom_call.1} parent=11 // pred_region
          _
        $region44: #{tpu_custom_call.1} parent=11 // pred_fallthru
          _
        // Predicated region
        $region45: #{tpu_custom_call.1} parent=11 // pred_check
          %p356 = pneg %p240
        $region46: #{tpu_custom_call.1} parent=11 // pred_check_branch
          %358 = sbr.rel (%p356) target = $region48
        $region47: #{tpu_custom_call.1} parent=11 // pred_region
          %s360 = ssub.s32 2048, 2048
          %361 = vsyncadd [#allocation9], %s360
          %s362 = sshll.u32 [#allocation10], 4
          %s363 = int_to_ptr.vmem [resolvable:$true] %s362
          %368 = dma.hbm_to_vmem [thread:$0]  %s9, 2048, %s363, [#allocation9], 128, 128, 8
        $region48: #{tpu_custom_call.1} parent=11 // pred_fallthru
          _
        // Predicated region
        $region49: #{tpu_custom_call.1} parent=11 // pred_check
          %p369 = pneg %p261
        $region50: #{tpu_custom_call.1} parent=11 // pred_check_branch
          %371 = sbr.rel (%p369) target = $region52
        $region51: #{tpu_custom_call.1} parent=11 // pred_region
          _
        $region52: #{tpu_custom_call.1} parent=11 // pred_fallthru
          _
      $region12: #{tpu_custom_call.1} parent=5 // pred_fallthru
        _
      %p372 = scmp.lt.s32.totalorder %s25, 2
      // Predicated region
      $region53: #{tpu_custom_call.1} parent=5 // pred_check
        %p373 = pneg %p372
      $region54: #{tpu_custom_call.1} parent=5 // pred_check_branch
        %375 = sbr.rel (%p373) target = $region56
      $region55: #{tpu_custom_call.1} parent=5 // pred_region
        // Predicated region
        $region57: #{tpu_custom_call.1} parent=55 // pred_check
          %p376 = pneg %p45
        $region58: #{tpu_custom_call.1} parent=55 // pred_check_branch
          %378 = sbr.rel (%p376) target = $region60
        $region59: #{tpu_custom_call.1} parent=55 // pred_region
          %s379 = sand.u32 %s35, 1
          %s380 = scalar_lea.sflag [#allocation3], %s379
          %s381 = sand.u32 %s35, 1
          %s382 = smul.addr %s381, 8
          %s383 = scalar_lea.vmem [#allocation2], %s382
          %s385 = ssub.s32 128, 128
          %386 = vsyncadd %s380, %s385
          %s387 = smul.addr %s25, 128
          %s388 = scalar_lea.hbm %s0, %s387
          %s390 = sshll.u32 %s383, 4
          %s391 = int_to_ptr.vmem [resolvable:$true] %s390
          %393 = dma.hbm_to_vmem [thread:$0]  %s388, 128, %s391, %s380
        $region60: #{tpu_custom_call.1} parent=55 // pred_fallthru
          _
      $region56: #{tpu_custom_call.1} parent=5 // pred_fallthru
        _
      %p394 = scmp.le.s32.totalorder 1, %s25
      %p395 = scmp.lt.s32.totalorder %s25, 3
      %p396 = pnand %p394, %p395
      %p397 = pneg %p396
      // Predicated region
      $region61: #{tpu_custom_call.1} parent=5 // pred_check
        _
      $region62: #{tpu_custom_call.1} parent=5 // pred_check_branch
        %399 = sbr.rel (%p396) target = $region64
      $region63: #{tpu_custom_call.1} parent=5 // pred_region
        %s400 = ssub.s32 %s25, 1
        %s401 = sand.u32 %s38, 1
        %s402 = scalar_lea.sflag [#allocation3], %s401
        %s403 = sand.u32 %s38, 1
        %s404 = smul.addr %s403, 8
        %s405 = scalar_lea.vmem [#allocation2], %s404
        // Predicated region
        $region65: #{tpu_custom_call.1} parent=63 // pred_check
          %p406 = pneg %p51
        $region66: #{tpu_custom_call.1} parent=63 // pred_check_branch
          %408 = sbr.rel (%p406) target = $region68
        $region67: #{tpu_custom_call.1} parent=63 // pred_region
          %409 = dma.done %s402, 128
        $region68: #{tpu_custom_call.1} parent=63 // pred_fallthru
          _
        // Predicated region
        $region69: #{tpu_custom_call.1} parent=63 // pred_check
          %p410 = pneg %p72
        $region70: #{tpu_custom_call.1} parent=63 // pred_check_branch
          %412 = sbr.rel (%p410) target = $region72
        $region71: #{tpu_custom_call.1} parent=63 // pred_region
          %413 = dma.done [#allocation6], 512
        $region72: #{tpu_custom_call.1} parent=63 // pred_fallthru
          _
        // Predicated region
        $region73: #{tpu_custom_call.1} parent=63 // pred_check
          %p414 = pneg %p156
        $region74: #{tpu_custom_call.1} parent=63 // pred_check_branch
          %416 = sbr.rel (%p414) target = $region76
        $region75: #{tpu_custom_call.1} parent=63 // pred_region
          %417 = dma.done [#allocation6], 2048
        $region76: #{tpu_custom_call.1} parent=63 // pred_fallthru
          _
        // Predicated region
        $region77: #{tpu_custom_call.1} parent=63 // pred_check
          %p418 = pneg %p198
        $region78: #{tpu_custom_call.1} parent=63 // pred_check_branch
          %420 = sbr.rel (%p418) target = $region80
        $region79: #{tpu_custom_call.1} parent=63 // pred_region
          %421 = dma.done [#allocation9], 2048
        $region80: #{tpu_custom_call.1} parent=63 // pred_fallthru
          _
        // Predicated region
        $region81: #{tpu_custom_call.1} parent=63 // pred_check
          %p422 = pneg %p240
        $region82: #{tpu_custom_call.1} parent=63 // pred_check_branch
          %424 = sbr.rel (%p422) target = $region84
        $region83: #{tpu_custom_call.1} parent=63 // pred_region
          %425 = dma.done [#allocation9], 2048
        $region84: #{tpu_custom_call.1} parent=63 // pred_fallthru
          _
        %s426 = sand.u32 %s38, 1
        %s427 = scalar_lea.sflag [#allocation3], %s426
        %s428 = sand.u32 %s38, 1
        %s429 = smul.addr %s428, 8
        %s430 = scalar_lea.vmem [#allocation2], %s429
        %p431 = pneg %p51
        %p432 = pneg %p48
        %p433 = pneg %p72
        %p434 = pneg %p69
        %p435 = pneg %p93
        %p436 = pneg %p90
        %p437 = pneg %p114
        %p438 = pneg %p111
        %p439 = pneg %p135
        %p440 = pneg %p132
        %p441 = pneg %p156
        %p442 = pneg %p153
        %p443 = pneg %p177
        %p444 = pneg %p174
        %p445 = pneg %p198
        %p446 = pneg %p195
        %p447 = pneg %p219
        %p448 = pneg %p216
        %p449 = pneg %p240
        %p450 = pneg %p237
        %p451 = pneg %p261
        %p452 = pneg %p258
        %p453 = pneg %p287
        %p454 = pneg %p284
        %s455 = sand.u32 %s274, 1
        %s456 = scalar_lea.sflag [#allocation4], %s455
        %s457 = sand.u32 %s274, 1
        %s458 = smul.addr %s457, 8
        %s459 = scalar_lea.vmem [#allocation11], %s458
        %v460 = vld [vmem:[%s405] sm:$0xff]
        %v461 = vld [vmem:[#allocation5] sm:$0xff]
        %v462 = vld [vmem:[#allocation5 + $0x8] sm:$0xff]
        %v463 = vld [vmem:[#allocation5 + $0x10] sm:$0xff]
        %v464 = vld [vmem:[#allocation5 + $0x18] sm:$0xff]
        %v465 = vld [vmem:[%s2] sm:$0x1]
        %v467 = vlaneseq
        %v468 = vshrl.u32 %v467, 7
        %v469 = vsub.s32 0, %v468
        %v470 = vrot.slane %v465, %v469
        %vm472 = vcmask 261120
        %v474 = vsel %vm472, %v460, 0
        %476 = vmatprep.subr.mxu0 0.0
        %477 = vmatpush1.msra.mxu0 %v461
        %478 = vmatprep.subr.mxu0 0.0
        %479 = vmatpush1.msra.mxu0 %v462
        %480 = vmatprep.subr.mxu0 0.0
        %481 = vmatpush1.msra.mxu0 %v463
        %482 = vmatprep.subr.mxu0 0.0
        %483 = vmatpush1.msra.mxu0 %v464
        %484 = vmatprep.subr.mxu0 0.0
        %485 = vmatpush1.msra.mxu0 0.0
        %486 = vmatprep.subr.mxu0 0.0
        %487 = vmatpush1.msra.mxu0 0.0
        %488 = vmatprep.subr.mxu0 0.0
        %489 = vmatpush1.msra.mxu0 0.0
        %490 = vmatprep.subr.mxu0 0.0
        %491 = vmatpush1.msra.mxu0 0.0
        %492 = vmatprep.subr.mxu0 0.0
        %493 = vmatpush1.msra.mxu0 0.0
        %494 = vmatprep.subr.mxu0 0.0
        %495 = vmatpush1.msra.mxu0 0.0
        %496 = vmatprep.subr.mxu0 0.0
        %497 = vmatpush1.msra.mxu0 0.0
        %498 = vmatprep.subr.mxu0 0.0
        %499 = vmatpush1.msra.mxu0 0.0
        %500 = vmatprep.subr.mxu0 0.0
        %501 = vmatpush1.msra.mxu0 0.0
        %502 = vmatprep.subr.mxu0 0.0
        %503 = vmatpush1.msra.mxu0 0.0
        %504 = vmatprep.subr.mxu0 0.0
        %505 = vmatpush1.msra.mxu0 0.0
        %506 = vmatprep.subr.mxu0 0.0
        %507 = vmatpush1.msra.mxu0 0.0
        %508 = vmatprep.subr.mxu0 0.0
        %509 = vmatpush1.msra.mxu0 0.0
        %510 = vmatprep.subr.mxu0 0.0
        %511 = vmatpush1.msra.mxu0 0.0
        %512 = vmatprep.subr.mxu0 0.0
        %513 = vmatpush1.msra.mxu0 0.0
        %514 = vmatprep.subr.mxu0 0.0
        %515 = vmatpush1.msra.mxu0 0.0
        %516 = vmatprep.subr.mxu0 0.0
        %517 = vmatpush1.msra.mxu0 0.0
        %518 = vmatprep.subr.mxu0 0.0
        %519 = vmatpush1.msra.mxu0 0.0
        %520 = vmatprep.subr.mxu0 0.0
        %521 = vmatpush1.msra.mxu0 0.0
        %522 = vmatprep.subr.mxu0 0.0
        %523 = vmatpush1.msra.mxu0 0.0
        %524 = vmatprep.subr.mxu0 0.0
        %525 = vmatpush1.msra.mxu0 0.0
        %526 = vmatprep.subr.mxu0 0.0
        %527 = vmatpush1.msra.mxu0 0.0
        %528 = vmatprep.subr.mxu0 0.0
        %529 = vmatpush1.msra.mxu0 0.0
        %530 = vmatprep.subr.mxu0 0.0
        %531 = vmatpush1.msra.mxu0 0.0
        %532 = vmatprep.subr.mxu0 0.0
        %533 = vmatpush1.msra.mxu0 0.0
        %534 = vmatprep.subr.mxu0 0.0
        %535 = vmatpush1.msra.mxu0 0.0
        %536 = vmatprep.subr.mxu0 0.0
        %537 = vmatpush1.msra.mxu0 0.0
        %538 = vmatprep.subr.mxu0 0.0
        %539 = vmatpush1.msra.mxu0 0.0
        %540 = vmatprep.mubr.f32.mxu0 0.0
        %541 = vmatmul.mubr.f32.gmra.mrb[0].mxu0 %v474
        %v542 = vpop.f32.mrb[0].mxu0
        %v543 = vadd.f32 %v470, %v542
        %v544 = vpop.f32.mrb[0].mxu0
        %545 = vdwg.mxu0
        %546 = vadd.xlane.f32.xlu0 %v543
        %v547 = vpop.xlane.xlu0 %546
        %v548 = vmul.f32 %v543, %v543
        %549 = vadd.xlane.f32.xlu0 %v548
        %v550 = vpop.xlane.xlu0 %549
        %v551 = vmul.f32 %v547, 0.03125
        %v552 = vmul.f32 %v550, 0.03125
        %v553 = vmul.f32 %v551, %v551
        %v554 = vsub.f32 %v552, %v553
        %v555 = vmax.f32 %v554, 0.0
        %v556 = vsub.f32 %v543, %v551
        %v557 = vadd.f32 %v555, 1e-05
        %v558 = vrsqrt.pop %v557
        %v559 = vmul.f32 %v556, %v558
        %v560 = vld [vmem:[%s3] sm:$0x1]
        %v562 = vlaneseq
        %v563 = vshrl.u32 %v562, 7
        %v564 = vsub.s32 0, %v563
        %v565 = vrot.slane %v560, %v564
        %v567 = vmul.f32 %v559, %v565
        %v568 = vld [vmem:[%s4] sm:$0x1]
        %v570 = vlaneseq
        %v571 = vshrl.u32 %v570, 7
        %v572 = vsub.s32 0, %v571
        %v573 = vrot.slane %v568, %v572
        %v575 = vadd.f32 %v567, %v573
        %v576 = vtanh.pop %v575
        %v577 = vld [vmem:[#allocation7] sm:$0xff]
        %v578 = vld [vmem:[#allocation7 + $0x8] sm:$0xff]
        %v579 = vld [vmem:[#allocation7 + $0x10] sm:$0xff]
        %v580 = vld [vmem:[#allocation7 + $0x18] sm:$0xff]
        %v581 = vld [vmem:[#allocation7 + $0x20] sm:$0xff]
        %v582 = vld [vmem:[#allocation7 + $0x28] sm:$0xff]
        %v583 = vld [vmem:[#allocation7 + $0x30] sm:$0xff]
        %v584 = vld [vmem:[#allocation7 + $0x38] sm:$0xff]
        %v585 = vld [vmem:[#allocation7 + $0x40] sm:$0xff]
        %v586 = vld [vmem:[#allocation7 + $0x48] sm:$0xff]
        %v587 = vld [vmem:[#allocation7 + $0x50] sm:$0xff]
        %v588 = vld [vmem:[#allocation7 + $0x58] sm:$0xff]
        %v589 = vld [vmem:[#allocation7 + $0x60] sm:$0xff]
        %v590 = vld [vmem:[#allocation7 + $0x68] sm:$0xff]
        %v591 = vld [vmem:[#allocation7 + $0x70] sm:$0xff]
        %v592 = vld [vmem:[#allocation7 + $0x78] sm:$0xff]
        %v593 = vld [vmem:[%s6] sm:$0x1]
        %v595 = vlaneseq
        %v596 = vshrl.u32 %v595, 7
        %v597 = vsub.s32 0, %v596
        %v598 = vrot.slane %v593, %v597
        %600 = vmatprep.subr.mxu0 0.0
        %601 = vmatpush1.msra.mxu0 %v577
        %602 = vmatprep.subr.mxu0 0.0
        %603 = vmatpush1.msra.mxu0 %v578
        %604 = vmatprep.subr.mxu0 0.0
        %605 = vmatpush1.msra.mxu0 %v579
        %606 = vmatprep.subr.mxu0 0.0
        %607 = vmatpush1.msra.mxu0 %v580
        %608 = vmatprep.subr.mxu0 0.0
        %609 = vmatpush1.msra.mxu0 %v581
        %610 = vmatprep.subr.mxu0 0.0
        %611 = vmatpush1.msra.mxu0 %v582
        %612 = vmatprep.subr.mxu0 0.0
        %613 = vmatpush1.msra.mxu0 %v583
        %614 = vmatprep.subr.mxu0 0.0
        %615 = vmatpush1.msra.mxu0 %v584
        %616 = vmatprep.subr.mxu0 0.0
        %617 = vmatpush1.msra.mxu0 %v585
        %618 = vmatprep.subr.mxu0 0.0
        %619 = vmatpush1.msra.mxu0 %v586
        %620 = vmatprep.subr.mxu0 0.0
        %621 = vmatpush1.msra.mxu0 %v587
        %622 = vmatprep.subr.mxu0 0.0
        %623 = vmatpush1.msra.mxu0 %v588
        %624 = vmatprep.subr.mxu0 0.0
        %625 = vmatpush1.msra.mxu0 %v589
        %626 = vmatprep.subr.mxu0 0.0
        %627 = vmatpush1.msra.mxu0 %v590
        %628 = vmatprep.subr.mxu0 0.0
        %629 = vmatpush1.msra.mxu0 %v591
        %630 = vmatprep.subr.mxu0 0.0
        %631 = vmatpush1.msra.mxu0 %v592
        %632 = vmatprep.subr.mxu0 0.0
        %633 = vmatpush1.msra.mxu0 0.0
        %634 = vmatprep.subr.mxu0 0.0
        %635 = vmatpush1.msra.mxu0 0.0
        %636 = vmatprep.subr.mxu0 0.0
        %637 = vmatpush1.msra.mxu0 0.0
        %638 = vmatprep.subr.mxu0 0.0
        %639 = vmatpush1.msra.mxu0 0.0
        %640 = vmatprep.subr.mxu0 0.0
        %641 = vmatpush1.msra.mxu0 0.0
        %642 = vmatprep.subr.mxu0 0.0
        %643 = vmatpush1.msra.mxu0 0.0
        %644 = vmatprep.subr.mxu0 0.0
        %645 = vmatpush1.msra.mxu0 0.0
        %646 = vmatprep.subr.mxu0 0.0
        %647 = vmatpush1.msra.mxu0 0.0
        %648 = vmatprep.subr.mxu0 0.0
        %649 = vmatpush1.msra.mxu0 0.0
        %650 = vmatprep.subr.mxu0 0.0
        %651 = vmatpush1.msra.mxu0 0.0
        %652 = vmatprep.subr.mxu0 0.0
        %653 = vmatpush1.msra.mxu0 0.0
        %654 = vmatprep.subr.mxu0 0.0
        %655 = vmatpush1.msra.mxu0 0.0
        %656 = vmatprep.subr.mxu0 0.0
        %657 = vmatpush1.msra.mxu0 0.0
        %658 = vmatprep.subr.mxu0 0.0
        %659 = vmatpush1.msra.mxu0 0.0
        %660 = vmatprep.subr.mxu0 0.0
        %661 = vmatpush1.msra.mxu0 0.0
        %662 = vmatprep.subr.mxu0 0.0
        %663 = vmatpush1.msra.mxu0 0.0
        %664 = vmatprep.mubr.f32.mxu0 0.0
        %665 = vmatmul.mubr.f32.gmra.mrb[0].mxu0 %v576
        %v666 = vpop.f32.mrb[0].mxu0
        %v667 = vadd.f32 %v598, %v666
        %v668 = vpop.f32.mrb[0].mxu0
        %669 = vdwg.mxu0
        %v670 = vmax.f32 %v667, 0.0
        %v671 = vld [vmem:[#allocation8] sm:$0xff]
        %v672 = vld [vmem:[#allocation8 + $0x8] sm:$0xff]
        %v673 = vld [vmem:[#allocation8 + $0x10] sm:$0xff]
        %v674 = vld [vmem:[#allocation8 + $0x18] sm:$0xff]
        %v675 = vld [vmem:[#allocation8 + $0x20] sm:$0xff]
        %v676 = vld [vmem:[#allocation8 + $0x28] sm:$0xff]
        %v677 = vld [vmem:[#allocation8 + $0x30] sm:$0xff]
        %v678 = vld [vmem:[#allocation8 + $0x38] sm:$0xff]
        %v679 = vld [vmem:[#allocation8 + $0x40] sm:$0xff]
        %v680 = vld [vmem:[#allocation8 + $0x48] sm:$0xff]
        %v681 = vld [vmem:[#allocation8 + $0x50] sm:$0xff]
        %v682 = vld [vmem:[#allocation8 + $0x58] sm:$0xff]
        %v683 = vld [vmem:[#allocation8 + $0x60] sm:$0xff]
        %v684 = vld [vmem:[#allocation8 + $0x68] sm:$0xff]
        %v685 = vld [vmem:[#allocation8 + $0x70] sm:$0xff]
        %v686 = vld [vmem:[#allocation8 + $0x78] sm:$0xff]
        %v687 = vld [vmem:[%s8] sm:$0x1]
        %v689 = vlaneseq
        %v690 = vshrl.u32 %v689, 7
        %v691 = vsub.s32 0, %v690
        %v692 = vrot.slane %v687, %v691
        %694 = vmatprep.subr.mxu0 0.0
        %695 = vmatpush1.msra.mxu0 %v671
        %696 = vmatprep.subr.mxu0 0.0
        %697 = vmatpush1.msra.mxu0 %v672
        %698 = vmatprep.subr.mxu0 0.0
        %699 = vmatpush1.msra.mxu0 %v673
        %700 = vmatprep.subr.mxu0 0.0
        %701 = vmatpush1.msra.mxu0 %v674
        %702 = vmatprep.subr.mxu0 0.0
        %703 = vmatpush1.msra.mxu0 %v675
        %704 = vmatprep.subr.mxu0 0.0
        %705 = vmatpush1.msra.mxu0 %v676
        %706 = vmatprep.subr.mxu0 0.0
        %707 = vmatpush1.msra.mxu0 %v677
        %708 = vmatprep.subr.mxu0 0.0
        %709 = vmatpush1.msra.mxu0 %v678
        %710 = vmatprep.subr.mxu0 0.0
        %711 = vmatpush1.msra.mxu0 %v679
        %712 = vmatprep.subr.mxu0 0.0
        %713 = vmatpush1.msra.mxu0 %v680
        %714 = vmatprep.subr.mxu0 0.0
        %715 = vmatpush1.msra.mxu0 %v681
        %716 = vmatprep.subr.mxu0 0.0
        %717 = vmatpush1.msra.mxu0 %v682
        %718 = vmatprep.subr.mxu0 0.0
        %719 = vmatpush1.msra.mxu0 %v683
        %720 = vmatprep.subr.mxu0 0.0
        %721 = vmatpush1.msra.mxu0 %v684
        %722 = vmatprep.subr.mxu0 0.0
        %723 = vmatpush1.msra.mxu0 %v685
        %724 = vmatprep.subr.mxu0 0.0
        %725 = vmatpush1.msra.mxu0 %v686
        %726 = vmatprep.subr.mxu0 0.0
        %727 = vmatpush1.msra.mxu0 0.0
        %728 = vmatprep.subr.mxu0 0.0
        %729 = vmatpush1.msra.mxu0 0.0
        %730 = vmatprep.subr.mxu0 0.0
        %731 = vmatpush1.msra.mxu0 0.0
        %732 = vmatprep.subr.mxu0 0.0
        %733 = vmatpush1.msra.mxu0 0.0
        %734 = vmatprep.subr.mxu0 0.0
        %735 = vmatpush1.msra.mxu0 0.0
        %736 = vmatprep.subr.mxu0 0.0
        %737 = vmatpush1.msra.mxu0 0.0
        %738 = vmatprep.subr.mxu0 0.0
        %739 = vmatpush1.msra.mxu0 0.0
        %740 = vmatprep.subr.mxu0 0.0
        %741 = vmatpush1.msra.mxu0 0.0
        %742 = vmatprep.subr.mxu0 0.0
        %743 = vmatpush1.msra.mxu0 0.0
        %744 = vmatprep.subr.mxu0 0.0
        %745 = vmatpush1.msra.mxu0 0.0
        %746 = vmatprep.subr.mxu0 0.0
        %747 = vmatpush1.msra.mxu0 0.0
        %748 = vmatprep.subr.mxu0 0.0
        %749 = vmatpush1.msra.mxu0 0.0
        %750 = vmatprep.subr.mxu0 0.0
        %751 = vmatpush1.msra.mxu0 0.0
        %752 = vmatprep.subr.mxu0 0.0
        %753 = vmatpush1.msra.mxu0 0.0
        %754 = vmatprep.subr.mxu0 0.0
        %755 = vmatpush1.msra.mxu0 0.0
        %756 = vmatprep.subr.mxu0 0.0
        %757 = vmatpush1.msra.mxu0 0.0
        %758 = vmatprep.mubr.f32.mxu0 0.0
        %759 = vmatmul.mubr.f32.gmra.mrb[0].mxu0 %v670
        %v760 = vpop.f32.mrb[0].mxu0
        %v761 = vadd.f32 %v692, %v760
        %v762 = vpop.f32.mrb[0].mxu0
        %763 = vdwg.mxu0
        %v764 = vmax.f32 %v761, 0.0
        %v765 = vld [vmem:[#allocation10] sm:$0xff]
        %v766 = vld [vmem:[#allocation10 + $0x8] sm:$0xff]
        %v767 = vld [vmem:[#allocation10 + $0x10] sm:$0xff]
        %v768 = vld [vmem:[#allocation10 + $0x18] sm:$0xff]
        %v769 = vld [vmem:[#allocation10 + $0x20] sm:$0xff]
        %v770 = vld [vmem:[#allocation10 + $0x28] sm:$0xff]
        %v771 = vld [vmem:[#allocation10 + $0x30] sm:$0xff]
        %v772 = vld [vmem:[#allocation10 + $0x38] sm:$0xff]
        %v773 = vld [vmem:[#allocation10 + $0x40] sm:$0xff]
        %v774 = vld [vmem:[#allocation10 + $0x48] sm:$0xff]
        %v775 = vld [vmem:[#allocation10 + $0x50] sm:$0xff]
        %v776 = vld [vmem:[#allocation10 + $0x58] sm:$0xff]
        %v777 = vld [vmem:[#allocation10 + $0x60] sm:$0xff]
        %v778 = vld [vmem:[#allocation10 + $0x68] sm:$0xff]
        %v779 = vld [vmem:[#allocation10 + $0x70] sm:$0xff]
        %v780 = vld [vmem:[#allocation10 + $0x78] sm:$0xff]
        %v781 = vld [vmem:[%s10] sm:$0x1]
        %v783 = vlaneseq
        %v784 = vshrl.u32 %v783, 7
        %v785 = vsub.s32 0, %v784
        %v786 = vrot.slane %v781, %v785
        %788 = vmatprep.subr.mxu0 0.0
        %789 = vmatpush1.msra.mxu0 %v765
        %790 = vmatprep.subr.mxu0 0.0
        %791 = vmatpush1.msra.mxu0 %v766
        %792 = vmatprep.subr.mxu0 0.0
        %793 = vmatpush1.msra.mxu0 %v767
        %794 = vmatprep.subr.mxu0 0.0
        %795 = vmatpush1.msra.mxu0 %v768
        %796 = vmatprep.subr.mxu0 0.0
        %797 = vmatpush1.msra.mxu0 %v769
        %798 = vmatprep.subr.mxu0 0.0
        %799 = vmatpush1.msra.mxu0 %v770
        %800 = vmatprep.subr.mxu0 0.0
        %801 = vmatpush1.msra.mxu0 %v771
        %802 = vmatprep.subr.mxu0 0.0
        %803 = vmatpush1.msra.mxu0 %v772
        %804 = vmatprep.subr.mxu0 0.0
        %805 = vmatpush1.msra.mxu0 %v773
        %806 = vmatprep.subr.mxu0 0.0
        %807 = vmatpush1.msra.mxu0 %v774
        %808 = vmatprep.subr.mxu0 0.0
        %809 = vmatpush1.msra.mxu0 %v775
        %810 = vmatprep.subr.mxu0 0.0
        %811 = vmatpush1.msra.mxu0 %v776
        %812 = vmatprep.subr.mxu0 0.0
        %813 = vmatpush1.msra.mxu0 %v777
        %814 = vmatprep.subr.mxu0 0.0
        %815 = vmatpush1.msra.mxu0 %v778
        %816 = vmatprep.subr.mxu0 0.0
        %817 = vmatpush1.msra.mxu0 %v779
        %818 = vmatprep.subr.mxu0 0.0
        %819 = vmatpush1.msra.mxu0 %v780
        %820 = vmatprep.subr.mxu0 0.0
        %821 = vmatpush1.msra.mxu0 0.0
        %822 = vmatprep.subr.mxu0 0.0
        %823 = vmatpush1.msra.mxu0 0.0
        %824 = vmatprep.subr.mxu0 0.0
        %825 = vmatpush1.msra.mxu0 0.0
        %826 = vmatprep.subr.mxu0 0.0
        %827 = vmatpush1.msra.mxu0 0.0
        %828 = vmatprep.subr.mxu0 0.0
        %829 = vmatpush1.msra.mxu0 0.0
        %830 = vmatprep.subr.mxu0 0.0
        %831 = vmatpush1.msra.mxu0 0.0
        %832 = vmatprep.subr.mxu0 0.0
        %833 = vmatpush1.msra.mxu0 0.0
        %834 = vmatprep.subr.mxu0 0.0
        %835 = vmatpush1.msra.mxu0 0.0
        %836 = vmatprep.subr.mxu0 0.0
        %837 = vmatpush1.msra.mxu0 0.0
        %838 = vmatprep.subr.mxu0 0.0
        %839 = vmatpush1.msra.mxu0 0.0
        %840 = vmatprep.subr.mxu0 0.0
        %841 = vmatpush1.msra.mxu0 0.0
        %842 = vmatprep.subr.mxu0 0.0
        %843 = vmatpush1.msra.mxu0 0.0
        %844 = vmatprep.subr.mxu0 0.0
        %845 = vmatpush1.msra.mxu0 0.0
        %846 = vmatprep.subr.mxu0 0.0
        %847 = vmatpush1.msra.mxu0 0.0
        %848 = vmatprep.subr.mxu0 0.0
        %849 = vmatpush1.msra.mxu0 0.0
        %850 = vmatprep.subr.mxu0 0.0
        %851 = vmatpush1.msra.mxu0 0.0
        %852 = vmatprep.mubr.f32.mxu0 0.0
        %853 = vmatmul.mubr.f32.gmra.mrb[0].mxu0 %v764
        %v854 = vpop.f32.mrb[0].mxu0
        %v855 = vadd.f32 %v786, %v854
        %v856 = vpop.f32.mrb[0].mxu0
        %857 = vdwg.mxu0
        %v858 = vtanh.pop %v855
        %859 = vst [vmem:[%s459] sm:$0xff] %v858
        %s860 = sand.u32 %s274, 1
        %s861 = scalar_lea.sflag [#allocation4], %s860
        %s862 = sand.u32 %s274, 1
        %s863 = smul.addr %s862, 8
        %s864 = scalar_lea.vmem [#allocation11], %s863
        // Predicated region
        $region85: #{tpu_custom_call.1} parent=63 // pred_check
          %p865 = pneg %p284
        $region86: #{tpu_custom_call.1} parent=63 // pred_check_branch
          %867 = sbr.rel (%p865) target = $region88
        $region87: #{tpu_custom_call.1} parent=63 // pred_region
          %s869 = ssub.s32 128, 128
          %870 = vsyncadd %s861, %s869
          %s871 = smul.addr %s30, 128
          %s872 = scalar_lea.hbm %s11, %s871
          %s874 = sshll.u32 %s864, 4
          %s875 = int_to_ptr.vmem [resolvable:$true] %s874
          %877 = dma.vmem_to_hbm [thread:$0]  %s875, 128, %s872, %s861
        $region88: #{tpu_custom_call.1} parent=63 // pred_fallthru
          _
      $region64: #{tpu_custom_call.1} parent=5 // pred_fallthru
        _
      %p878 = scmp.le.s32.totalorder 2, %s25
      // Predicated region
      $region89: #{tpu_custom_call.1} parent=5 // pred_check
        %p879 = pneg %p878
      $region90: #{tpu_custom_call.1} parent=5 // pred_check_branch
        %881 = sbr.rel (%p879) target = $region92
      $region91: #{tpu_custom_call.1} parent=5 // pred_region
        %s882 = ssub.s32 %s25, 2
        // Predicated region
        $region93: #{tpu_custom_call.1} parent=91 // pred_check
          %p883 = pneg %p290
        $region94: #{tpu_custom_call.1} parent=91 // pred_check_branch
          %885 = sbr.rel (%p883) target = $region96
        $region95: #{tpu_custom_call.1} parent=91 // pred_region
          %s886 = sand.u32 %s275, 1
          %s887 = scalar_lea.sflag [#allocation4], %s886
          %s888 = sand.u32 %s275, 1
          %s889 = smul.addr %s888, 8
          %s890 = scalar_lea.vmem [#allocation11], %s889
          %891 = dma.done %s887, 128
        $region96: #{tpu_custom_call.1} parent=91 // pred_fallthru
          _
      $region92: #{tpu_custom_call.1} parent=5 // pred_fallthru
        _
    $region6: #{tpu_custom_call.1} parent=1 // loop_footer
      %s29 = sadd.s32 1, %s25
    $region7: #{tpu_custom_call.1} parent=1 // loop_footer_branch
      %24 = sbr.rel target = $region3
    $region8: #{tpu_custom_call.1} parent=1 // loop_exit
      _
    %892 = vsyncpa [#allocation3], 1
    %s893 = scalar_lea.sflag [#allocation3], 1
    %894 = vsyncpa %s893, 1
    %895 = vsyncpa [#allocation6], 1
    %896 = vsyncpa [#allocation9], 1
    %897 = vsyncpa [#allocation4], 1
    %s898 = scalar_lea.sflag [#allocation4], 1
    %899 = vsyncpa %s898, 1

</llo_original>
